<compile_context>
chip_gen: v7x
topology: tpu7x:2x2x1
jax: 0.10.0
libtpu: 0.0.40
codegen_flags: <defaults>
</compile_context>

<pallas_src>
import numpy as np
import jax
import jax.numpy as jnp
from jax import lax
from jax.experimental import pallas as pl
from jax.experimental.pallas import tpu as pltpu

BN_EPS = 1e-5   # PyTorch BatchNorm1d default eps
D_PAD = 128     # lane-padded feature width
NC_PAD = 128    # lane-padded class width
N_LAYERS = 2    # hidden_dims = [32, 32]
BBLK = 4        # graph-batches packed block-diagonally per grid step (use 2 on v5e)


def gcnnet2_kernel(x_ref, a_ref, w_ref, vec_ref, out_ref):
    """Fused forward for one packed super-batch (one grid step).

    x_ref:   (Np, D_PAD)        bf16 node features of Bblk batches, lane-padded
    a_ref:   (Np, Np)           bf16 block-diag of diag(snorm) @ D^-1/2 A D^-1/2
    w_ref:   (4, D_PAD, D_PAD)  bf16 [w_emb, w1*bn_scale1, w2*bn_scale2, w_out(pad)]
    vec_ref: (8, D_PAD)         f32  [b_emb, snorm*b1'+shift1, snorm*b2'+shift2, 0...]
    out_ref: (Gp, NC_PAD)       f32 lane-dense logits (first n_classes cols valid)
    """
    n = x_ref.shape[0]          # packed node count (Bblk * N)
    g = out_ref.shape[0]        # packed graph count (Bblk * G)
    npg = n // g                # nodes per graph (equal-size graphs)

    a = a_ref[...]              # snorm already folded into rows (host side)

    # embedding_h: Linear(in_dim, in_dim)   (bf16 MXU operands, f32 accumulate)
    h = jnp.dot(x_ref[...], w_ref[0],
                preferred_element_type=jnp.float32) + vec_ref[0:1, :]

    # GCN layers; BatchNorm + graph_norm folded into W / bias on the host:
    #   h = h + relu( A_s @ (h @ W') + bias' )
    for i in range(N_LAYERS):
        hw = jnp.dot(h.astype(jnp.bfloat16), w_ref[1 + i],
                     preferred_element_type=jnp.float32)
        agg = jnp.dot(a, hw.astype(jnp.bfloat16),
                      preferred_element_type=jnp.float32) + vec_ref[1 + i:2 + i, :]
        h = h + jnp.maximum(agg, 0.0)          # ReLU + residual in f32 (VPU)

    # dgl.mean_nodes: constant pooling matrix matmul (no reshape copy, MXU slack)
    row = lax.broadcasted_iota(jnp.int32, (g, n), 0)
    col = lax.broadcasted_iota(jnp.int32, (g, n), 1)
    pool = jnp.where((col >= row * npg) & (col < (row + 1) * npg),
                     1.0 / npg, 0.0).astype(jnp.bfloat16)
    hg = jnp.dot(pool, h.astype(jnp.bfloat16), preferred_element_type=jnp.float32)

    # readout_mlp: Linear(hidden[-1], n_classes, bias=False), lane-padded output
    out_ref[...] = jnp.dot(hg.astype(jnp.bfloat16), w_ref[3],
                           preferred_element_type=jnp.float32)


def gcnnet2_forward(x_pack, a_pack, w_stack, vec_stack, *, graphs_per_step, n_classes):
    """x_pack: (S, Np, D_PAD) bf16; a_pack: (S, Np, Np) bf16; returns (S, Gp, n_classes) f32."""
    steps, n_pack, d_pad = x_pack.shape
    g_pack = graphs_per_step

    flops = steps * (
        2 * n_pack * d_pad * d_pad * (1 + N_LAYERS)      # embedding + per-layer h@W
        + 2 * n_pack * n_pack * d_pad * N_LAYERS         # per-layer A@(hW)
        + 2 * g_pack * n_pack * d_pad                    # mean-pool matmul
        + 2 * g_pack * d_pad * NC_PAD)                   # readout
    bytes_accessed = (
        x_pack.size * x_pack.dtype.itemsize
        + a_pack.size * a_pack.dtype.itemsize
        + steps * (w_stack.size * w_stack.dtype.itemsize
                   + vec_stack.size * vec_stack.dtype.itemsize)
        + steps * g_pack * NC_PAD * 4)

    out = pl.pallas_call(
        gcnnet2_kernel,
        out_shape=jax.ShapeDtypeStruct((steps, g_pack, NC_PAD), jnp.float32),
        grid=(steps,),
        in_specs=[
            pl.BlockSpec((None, n_pack, d_pad), lambda b: (b, 0, 0)),    # packed node feats
            pl.BlockSpec((None, n_pack, n_pack), lambda b: (b, 0, 0)),   # packed block-diag A
            pl.BlockSpec((4, D_PAD, D_PAD), lambda b: (0, 0, 0)),        # shared weight stack
            pl.BlockSpec((8, D_PAD), lambda b: (0, 0)),                  # shared bias stack
        ],
        out_specs=pl.BlockSpec((None, g_pack, NC_PAD), lambda b: (b, 0, 0)),
        compiler_params=pltpu.CompilerParams(dimension_semantics=("parallel",)),
        cost_estimate=pl.CostEstimate(flops=int(flops), transcendentals=0,
                                      bytes_accessed=int(bytes_accessed)),
    )(x_pack, a_pack, w_stack, vec_stack)
    return out[:, :, :n_classes]


def pack_params(p, snorm_scalar):
    """Host-side: fold BatchNorm (eval) + graph_norm into W / bias, pad, stack, cast MXU operands."""
    def pad2(a, rows, cols):
        a = np.asarray(a, np.float32)
        out = np.zeros((rows, cols), np.float32)
        out[:a.shape[0], :a.shape[1]] = a
        return out

    w_stack = np.zeros((4, D_PAD, D_PAD), np.float32)
    vec_stack = np.zeros((8, D_PAD), np.float32)

    w_stack[0] = pad2(p["w_emb"], D_PAD, D_PAD)
    vec_stack[0] = pad2(p["b_emb"], 1, D_PAD)[0]

    for i in range(N_LAYERS):
        l = str(i + 1)
        scale = np.asarray(p["g" + l], np.float32) / np.sqrt(
            np.asarray(p["rv" + l], np.float32) + BN_EPS)              # per-channel
        w_fold = np.asarray(p["w" + l], np.float32) * scale            # BN scale into W cols
        b_fold = np.asarray(p["b" + l], np.float32) * scale
        shift = np.asarray(p["be" + l], np.float32) - np.asarray(p["rm" + l], np.float32) * scale
        w_stack[1 + i] = pad2(w_fold, D_PAD, D_PAD)
        # (A@hW + b)*snorm + shift == (snorm*A)@hW + (snorm*b + shift)
        # snorm is a constant scalar here (all graphs have equal node counts).
        vec_stack[1 + i] = pad2(snorm_scalar * b_fold + shift, 1, D_PAD)[0]

    w_stack[3] = pad2(p["w_out"], D_PAD, NC_PAD)
    return jnp.asarray(w_stack, jnp.bfloat16), jnp.asarray(vec_stack, jnp.float32)


def pack_batches(nodes_feat, a_scaled, bblk):
    """Pack Bblk batches block-diagonally per grid step; lane-pad features; cast to bf16."""
    B, N, D = nodes_feat.shape
    assert B % bblk == 0, "number of graph-batches must be divisible by BBLK"
    steps = B // bblk
    n_pack = bblk * N
    x = np.zeros((steps, n_pack, D_PAD), np.float32)
    a = np.zeros((steps, n_pack, n_pack), np.float32)
    for s in range(steps):
        for j in range(bblk):
            b = s * bblk + j
            x[s, j * N:(j + 1) * N, :D] = np.asarray(nodes_feat[b])
            a[s, j * N:(j + 1) * N, j * N:(j + 1) * N] = np.asarray(a_scaled[b])
    return jnp.asarray(x, jnp.bfloat16), jnp.asarray(a, jnp.bfloat16)


def reference_forward(nodes_feat, a_norm, snorm_n, num_graphs, p):
    """Pure-JAX f32 reference of the same forward (unpadded, unfolded) for one batch."""
    h = nodes_feat @ p["w_emb"] + p["b_emb"]
    for l in ("1", "2"):
        h_in = h
        agg = a_norm @ (h @ p["w" + l]) + p["b" + l]
        agg = agg * snorm_n
        bn = (agg - p["rm" + l]) / jnp.sqrt(p["rv" + l] + BN_EPS) * p["g" + l] + p["be" + l]
        h = h_in + jnp.maximum(bn, 0.0)
    N, D = h.shape
    hg = h.reshape(num_graphs, N // num_graphs, D).mean(axis=1)
    return hg @ p["w_out"]


def build_graph(num_graphs, nodes_per_graph):
    """Block-diagonal ring graphs (undirected, no self loops), DGL 'both' normalization."""
    N = num_graphs * nodes_per_graph
    A = np.zeros((N, N), dtype=np.float32)
    for g in range(num_graphs):
        base = g * nodes_per_graph
        for i in range(nodes_per_graph):
            j = (i + 1) % nodes_per_graph
            A[base + i, base + j] = 1.0
            A[base + j, base + i] = 1.0
    deg = A.sum(axis=1)
    d_inv_sqrt = 1.0 / np.sqrt(np.maximum(deg, 1.0))
    a_norm = (A * d_inv_sqrt[:, None]) * d_inv_sqrt[None, :]
    snorm_scalar = 1.0 / np.sqrt(nodes_per_graph)     # equal-size graphs -> constant snorm
    return a_norm, snorm_scalar


def init_params(key, in_dim, hidden_dims, n_classes):
    """Deterministic synthetic parameters (PyTorch Linear weights stored transposed: (in, out))."""
    ks = list(jax.random.split(key, 16))
    p = {}
    p["w_emb"] = 0.1 * jax.random.normal(ks[0], (in_dim, in_dim), jnp.float32)
    p["b_emb"] = 0.1 * jax.random.normal(ks[1], (1, in_dim), jnp.float32)
    d_in = in_dim
    for i, d_out in enumerate(hidden_dims, start=1):
        s = str(i)
        p["w" + s] = 0.1 * jax.random.normal(ks[2 + 6 * (i - 1)], (d_in, d_out), jnp.float32)
        p["b" + s] = 0.1 * jax.random.normal(ks[3 + 6 * (i - 1)], (1, d_out), jnp.float32)
        p["g" + s] = 1.0 + 0.1 * jax.random.normal(ks[4 + 6 * (i - 1)], (1, d_out), jnp.float32)
        p["be" + s] = 0.1 * jax.random.normal(ks[5 + 6 * (i - 1)], (1, d_out), jnp.float32)
        p["rm" + s] = 0.05 * jax.random.normal(ks[6 + 6 * (i - 1)], (1, d_out), jnp.float32)
        p["rv" + s] = 1.0 + 0.1 * jnp.abs(jax.random.normal(ks[7 + 6 * (i - 1)], (1, d_out), jnp.float32))
        d_in = d_out
    p["w_out"] = 0.1 * jax.random.normal(ks[14], (hidden_dims[-1], n_classes), jnp.float32)
    return p


if __name__ == "__main__":
    # 16 graph-batches, each = 4 graphs x 16 nodes, in_dim=32, hidden_dims=[32,32]
    # (residual valid: in_dim == out_dim), 10 classes.
    # Packed 4-per-step block-diagonally -> grid=(4,), per-step A is (256,256).
    B = 16
    num_graphs, nodes_per_graph = 4, 16
    in_dim, hidden_dims, n_classes = 32, [32, 32], 10
    N = num_graphs * nodes_per_graph
    assert N % num_graphs == 0  # equal-size, contiguous per-graph node blocks (mean_nodes + snorm fold)

    key = jax.random.PRNGKey(0)
    k_feat, k_param, k_edge = jax.random.split(key, 3)

    nodes_feat = jax.random.normal(k_feat, (B, N, in_dim), jnp.float32)
    a_np, snorm_scalar = build_graph(num_graphs, nodes_per_graph)

    params = init_params(k_param, in_dim, hidden_dims, n_classes)
    w_stack, vec_stack = pack_params(params, snorm_scalar)

    # Fold diag(snorm) into A rows (constant scalar here) and pack batches block-diagonally.
    a_scaled = np.broadcast_to(snorm_scalar * a_np, (B, N, N))
    x_pack, a_pack = pack_batches(nodes_feat, a_scaled, BBLK)

    # edges_feat / edges_num_norm_sqrt are part of the PyTorch signature but unused by forward().
    edges_feat = jax.random.normal(k_edge, (B, 2 * N, 1), jnp.float32)                 # unused
    edges_num_norm_sqrt = jnp.full((B, 2 * N, 1), 1.0 / np.sqrt(2 * nodes_per_graph))  # unused

    logits = gcnnet2_forward(x_pack, a_pack, w_stack, vec_stack,
                             graphs_per_step=BBLK * num_graphs, n_classes=n_classes)
    logits = jax.block_until_ready(logits)
    # (steps, Bblk*G, nc) -> (B, G, nc); graphs within a step are ordered by source batch.
    logits = np.asarray(logits).reshape(B, num_graphs, n_classes)

    snorm_col = jnp.full((N, 1), snorm_scalar, jnp.float32)
    ref = jnp.stack([reference_forward(nodes_feat[b], jnp.asarray(a_np),
                                       snorm_col, num_graphs, params)
                     for b in range(B)], axis=0)
    # bf16 MXU operands (f32 accumulate) -> loosened tolerance vs the f32 reference.
    np.testing.assert_allclose(logits, np.asarray(ref), rtol=2e-2, atol=2e-2)

    # TODO(synk): BatchNorm1d is implemented in eval mode (running stats folded into W/b);
    # training-mode batch statistics / running-stat updates and ragged DGL graph sizes
    # (non-equal node counts per graph) are not reproduced.
    print("KERNEL_OK")
</pallas_src>

<mosaic_0001>
module attributes {stable_mosaic.version = 11 : i64} {
  func.func @gcnnet2_kernel(%arg0: i32, %arg1: memref<1x256x128xbf16, #tpu.memory_space<vmem>>, %arg2: memref<1x256x256xbf16, #tpu.memory_space<vmem>>, %arg3: memref<4x128x128xbf16, #tpu.memory_space<vmem>>, %arg4: memref<8x128xf32, #tpu.memory_space<vmem>>, %arg5: memref<1x16x128xf32, #tpu.memory_space<vmem>>) attributes {dimension_semantics = [#tpu.dimension_semantics<parallel>], iteration_bounds = array<i64: 4>, scalar_prefetch = 0 : i64, scratch_operands = 0 : i64, tpu.core_type = #tpu.core_type<tc>, window_params = [{transform_indices = @transform_0, window_bounds = array<i64: 1, 256, 128>}, {transform_indices = @transform_1, window_bounds = array<i64: 1, 256, 256>}, {pipeline_mode = #tpu.pipeline_mode<synchronous>, transform_indices = @transform_2, window_bounds = array<i64: 4, 128, 128>}, {pipeline_mode = #tpu.pipeline_mode<synchronous>, transform_indices = @transform_3, window_bounds = array<i64: 8, 128>}, {transform_indices = @transform_4, window_bounds = array<i64: 1, 16, 128>}]} {
    %c0 = arith.constant 0 : index
    %c0_0 = arith.constant 0 : index
    %c0_1 = arith.constant 0 : index
    %0 = vector.load %arg2[%c0, %c0_0, %c0_1] : memref<1x256x256xbf16, #tpu.memory_space<vmem>>, vector<1x256x256xbf16>
    %1 = vector.shape_cast %0 : vector<1x256x256xbf16> to vector<256x256xbf16>
    %c0_2 = arith.constant 0 : index
    %c0_3 = arith.constant 0 : index
    %c0_4 = arith.constant 0 : index
    %2 = vector.load %arg1[%c0_2, %c0_3, %c0_4] : memref<1x256x128xbf16, #tpu.memory_space<vmem>>, vector<1x256x128xbf16>
    %3 = vector.shape_cast %2 : vector<1x256x128xbf16> to vector<256x128xbf16>
    %c0_5 = arith.constant 0 : index
    %c0_6 = arith.constant 0 : index
    %c0_7 = arith.constant 0 : index
    %4 = vector.load %arg3[%c0_5, %c0_6, %c0_7] : memref<4x128x128xbf16, #tpu.memory_space<vmem>>, vector<1x128x128xbf16>
    %5 = vector.shape_cast %4 : vector<1x128x128xbf16> to vector<128x128xbf16>
    %cst = arith.constant dense<0.000000e+00> : vector<256x128xf32>
    %6 = tpu.matmul %3, %5, %cst {dimension_numbers = #tpu.dot_dimension_numbers<[1], [0], [0], [1], [0, 0, 1, 1], [], []>} : vector<256x128xbf16>, vector<128x128xbf16>, vector<256x128xf32> -> vector<256x128xf32>
    %c0_8 = arith.constant 0 : index
    %c0_9 = arith.constant 0 : index
    %7 = vector.load %arg4[%c0_8, %c0_9] : memref<8x128xf32, #tpu.memory_space<vmem>>, vector<1x128xf32>
    %8 = vector.broadcast %7 : vector<1x128xf32> to vector<256x128xf32>
    %9 = arith.addf %6, %8 : vector<256x128xf32>
    %10 = arith.truncf %9 : vector<256x128xf32> to vector<256x128xbf16>
    %c1 = arith.constant 1 : index
    %c0_10 = arith.constant 0 : index
    %c0_11 = arith.constant 0 : index
    %11 = vector.load %arg3[%c1, %c0_10, %c0_11] : memref<4x128x128xbf16, #tpu.memory_space<vmem>>, vector<1x128x128xbf16>
    %12 = vector.shape_cast %11 : vector<1x128x128xbf16> to vector<128x128xbf16>
    %cst_12 = arith.constant dense<0.000000e+00> : vector<256x128xf32>
    %13 = tpu.matmul %10, %12, %cst_12 {dimension_numbers = #tpu.dot_dimension_numbers<[1], [0], [0], [1], [0, 0, 1, 1], [], []>} : vector<256x128xbf16>, vector<128x128xbf16>, vector<256x128xf32> -> vector<256x128xf32>
    %14 = arith.truncf %13 : vector<256x128xf32> to vector<256x128xbf16>
    %cst_13 = arith.constant dense<0.000000e+00> : vector<256x128xf32>
    %15 = tpu.matmul %1, %14, %cst_13 {dimension_numbers = #tpu.dot_dimension_numbers<[1], [0], [0], [1], [0, 0, 1, 1], [], []>} : vector<256x256xbf16>, vector<256x128xbf16>, vector<256x128xf32> -> vector<256x128xf32>
    %c1_14 = arith.constant 1 : index
    %c0_15 = arith.constant 0 : index
    %16 = vector.load %arg4[%c1_14, %c0_15] : memref<8x128xf32, #tpu.memory_space<vmem>>, vector<1x128xf32>
    %17 = vector.broadcast %16 : vector<1x128xf32> to vector<256x128xf32>
    %18 = arith.addf %15, %17 : vector<256x128xf32>
    %cst_16 = arith.constant 0.000000e+00 : f32
    %19 = vector.broadcast %cst_16 : f32 to vector<256x128xf32>
    %20 = arith.maximumf %18, %19 : vector<256x128xf32>
    %21 = arith.addf %9, %20 : vector<256x128xf32>
    %22 = arith.truncf %21 : vector<256x128xf32> to vector<256x128xbf16>
    %c2 = arith.constant 2 : index
    %c0_17 = arith.constant 0 : index
    %c0_18 = arith.constant 0 : index
    %23 = vector.load %arg3[%c2, %c0_17, %c0_18] : memref<4x128x128xbf16, #tpu.memory_space<vmem>>, vector<1x128x128xbf16>
    %24 = vector.shape_cast %23 : vector<1x128x128xbf16> to vector<128x128xbf16>
    %cst_19 = arith.constant dense<0.000000e+00> : vector<256x128xf32>
    %25 = tpu.matmul %22, %24, %cst_19 {dimension_numbers = #tpu.dot_dimension_numbers<[1], [0], [0], [1], [0, 0, 1, 1], [], []>} : vector<256x128xbf16>, vector<128x128xbf16>, vector<256x128xf32> -> vector<256x128xf32>
    %26 = arith.truncf %25 : vector<256x128xf32> to vector<256x128xbf16>
    %cst_20 = arith.constant dense<0.000000e+00> : vector<256x128xf32>
    %27 = tpu.matmul %1, %26, %cst_20 {dimension_numbers = #tpu.dot_dimension_numbers<[1], [0], [0], [1], [0, 0, 1, 1], [], []>} : vector<256x256xbf16>, vector<256x128xbf16>, vector<256x128xf32> -> vector<256x128xf32>
    %c2_21 = arith.constant 2 : index
    %c0_22 = arith.constant 0 : index
    %28 = vector.load %arg4[%c2_21, %c0_22] : memref<8x128xf32, #tpu.memory_space<vmem>>, vector<1x128xf32>
    %29 = vector.broadcast %28 : vector<1x128xf32> to vector<256x128xf32>
    %30 = arith.addf %27, %29 : vector<256x128xf32>
    %cst_23 = arith.constant 0.000000e+00 : f32
    %31 = vector.broadcast %cst_23 : f32 to vector<256x128xf32>
    %32 = arith.maximumf %30, %31 : vector<256x128xf32>
    %33 = arith.addf %21, %32 : vector<256x128xf32>
    %34 = tpu.iota {dimensions = array<i32: 0>} : vector<16x256xi32>
    %35 = tpu.iota {dimensions = array<i32: 1>} : vector<16x256xi32>
    %c16_i32 = arith.constant 16 : i32
    %36 = vector.broadcast %c16_i32 : i32 to vector<16x256xi32>
    %37 = arith.muli %34, %36 : vector<16x256xi32>
    %38 = arith.cmpi sge, %35, %37 : vector<16x256xi32>
    %c1_i32 = arith.constant 1 : i32
    %39 = vector.broadcast %c1_i32 : i32 to vector<16x256xi32>
    %40 = arith.addi %34, %39 : vector<16x256xi32>
    %c16_i32_24 = arith.constant 16 : i32
    %41 = vector.broadcast %c16_i32_24 : i32 to vector<16x256xi32>
    %42 = arith.muli %40, %41 : vector<16x256xi32>
    %43 = arith.cmpi slt, %35, %42 : vector<16x256xi32>
    %44 = arith.andi %38, %43 : vector<16x256xi1>
    %cst_25 = arith.constant 6.250000e-02 : f32
    %cst_26 = arith.constant 0.000000e+00 : f32
    %45 = vector.broadcast %cst_25 : f32 to vector<16x256xf32>
    %46 = vector.broadcast %cst_26 : f32 to vector<16x256xf32>
    %47 = arith.select %44, %45, %46 : vector<16x256xi1>, vector<16x256xf32>
    %48 = arith.truncf %47 : vector<16x256xf32> to vector<16x256xbf16>
    %49 = arith.truncf %33 : vector<256x128xf32> to vector<256x128xbf16>
    %cst_27 = arith.constant dense<0.000000e+00> : vector<16x128xf32>
    %50 = tpu.matmul %48, %49, %cst_27 {dimension_numbers = #tpu.dot_dimension_numbers<[1], [0], [0], [1], [0, 0, 1, 1], [], []>} : vector<16x256xbf16>, vector<256x128xbf16>, vector<16x128xf32> -> vector<16x128xf32>
    %51 = arith.truncf %50 : vector<16x128xf32> to vector<16x128xbf16>
    %c3 = arith.constant 3 : index
    %c0_28 = arith.constant 0 : index
    %c0_29 = arith.constant 0 : index
    %52 = vector.load %arg3[%c3, %c0_28, %c0_29] : memref<4x128x128xbf16, #tpu.memory_space<vmem>>, vector<1x128x128xbf16>
    %53 = vector.shape_cast %52 : vector<1x128x128xbf16> to vector<128x128xbf16>
    %cst_30 = arith.constant dense<0.000000e+00> : vector<16x128xf32>
    %54 = tpu.matmul %51, %53, %cst_30 {dimension_numbers = #tpu.dot_dimension_numbers<[1], [0], [0], [1], [0, 0, 1, 1], [], []>} : vector<16x128xbf16>, vector<128x128xbf16>, vector<16x128xf32> -> vector<16x128xf32>
    %c0_31 = arith.constant 0 : index
    %c0_32 = arith.constant 0 : index
    %c0_33 = arith.constant 0 : index
    %55 = vector.load %arg5[%c0_31, %c0_32, %c0_33] : memref<1x16x128xf32, #tpu.memory_space<vmem>>, vector<1x16x128xf32>
    %56 = vector.shape_cast %55 : vector<1x16x128xf32> to vector<16x128xf32>
    %57 = vector.shape_cast %54 : vector<16x128xf32> to vector<1x16x128xf32>
    tpu.vector_store %arg5[%c0_31, %c0_32, %c0_33], %57 {strides = array<i32>} : memref<1x16x128xf32, #tpu.memory_space<vmem>>, vector<1x16x128xf32>,
    return
  }
  func.func @transform_0(%arg0: i32) -> (i32, i32, i32) {
    %c0_i32 = arith.constant 0 : i32
    %c0_i32_0 = arith.constant 0 : i32
    %c0_i32_1 = arith.constant 0 : i32
    return %arg0, %c0_i32, %c0_i32_0 : i32, i32, i32
  }
  func.func @transform_1(%arg0: i32) -> (i32, i32, i32) {
    %c0_i32 = arith.constant 0 : i32
    %c0_i32_0 = arith.constant 0 : i32
    %c0_i32_1 = arith.constant 0 : i32
    return %arg0, %c0_i32, %c0_i32_0 : i32, i32, i32
  }
  func.func @transform_2(%arg0: i32) -> (i32, i32, i32) {
    %c0_i32 = arith.constant 0 : i32
    %c0_i32_0 = arith.constant 0 : i32
    %c0_i32_1 = arith.constant 0 : i32
    %c0_i32_2 = arith.constant 0 : i32
    return %c0_i32, %c0_i32_0, %c0_i32_1 : i32, i32, i32
  }
  func.func @transform_3(%arg0: i32) -> (i32, i32) {
    %c0_i32 = arith.constant 0 : i32
    %c0_i32_0 = arith.constant 0 : i32
    %c0_i32_1 = arith.constant 0 : i32
    return %c0_i32, %c0_i32_0 : i32, i32
  }
  func.func @transform_4(%arg0: i32) -> (i32, i32, i32) {
    %c0_i32 = arith.constant 0 : i32
    %c0_i32_0 = arith.constant 0 : i32
    %c0_i32_1 = arith.constant 0 : i32
    return %arg0, %c0_i32, %c0_i32_0 : i32, i32, i32
  }
}

</mosaic_0001>

<llo_original>
// kernel: tpu_custom_call.1
$region0: #{tpu_custom_call.1}
  #allocation0 [shape = 'u32[]', space=smem, size = 0x4, offset = 0x4, fixed_abs, tag = 'smem constant byte address 0x4 - core index']
  #allocation1 [shape = 'u32[144,128]{1,0:T(1,128)}', space=vmem, size = 0x12000, scoped, tag = 'internal scratch']
  %s0 = inlined_call_operand.hbm [shape: bf16[4,256,128], index: 0, kind: input, shape index: {}]
  %s1 = inlined_call_operand.hbm [shape: bf16[4,256,256], index: 1, kind: input, shape index: {}]
  %s2 = inlined_call_operand.hbm [shape: bf16[4,128,128], index: 2, kind: input, shape index: {}]
  %s3 = inlined_call_operand.vmem [shape: f32[8,128], index: 3, kind: input, shape index: {}]
  %s4 = inlined_call_operand.hbm [shape: f32[4,16,128], index: 4, kind: output, shape index: {}]
  %s5 = sld [smem:[#allocation0]]
  $region61: #{tpu_custom_call.1} parent=0
    _
  %s7 = ssub.s32 1, %s5
  %s8 = scalar_select 0, %s7, %s5
  $region1: #{tpu_custom_call.1} parent=0
    #allocation2 [shape = 'u8[131072]{0}', space=vmem, size = 0x20000, scoped, tag = 'input window, operand 0']
    #allocation3 [shape = 's32[2]{0}', space=sflag, size = 0x8, scoped, tag = 'scoped memory for tpu_custom_call.1']
    #allocation4 [shape = 's32[2]{0}', space=sflag, size = 0x8, scoped, tag = 'scoped memory for tpu_custom_call.1']
    #allocation5 [shape = 'u8[262144]{0}', space=vmem, size = 0x40000, scoped, tag = 'input window, operand 1']
    #allocation6 [shape = 's32[2]{0}', space=sflag, size = 0x8, scoped, tag = 'scoped memory for tpu_custom_call.1']
    #allocation7 [shape = 'u8[131072]{0}', space=vmem, size = 0x20000, scoped, tag = 'input window, operand 2, single buffered']
    #allocation8 [shape = 'u8[16384]{0}', space=vmem, size = 0x4000, scoped, tag = 'output window, operand 0']
    %9 = vsyncpa [#allocation3], 0
    %s10 = scalar_lea.sflag [#allocation3], 1
    %11 = vsyncpa %s10, 0
    %12 = vsyncpa [#allocation6], 0
    %s13 = scalar_lea.sflag [#allocation6], 1
    %14 = vsyncpa %s13, 0
    %15 = vsyncpa [#allocation4], 0
    %s16 = scalar_lea.sflag [#allocation4], 1
    %17 = vsyncpa %s16, 0
    loop: start=0, step=1, limit=6
    $region2: #{tpu_custom_call.1} parent=1 // loop_pre_header
      _
    $region3: #{tpu_custom_call.1} parent=1 // loop_header
      %s19 = sphi 0, %s23
      %p20 = scmp.ge.s32.totalorder %s19, 6
      %s29 = sphi 0, %s31
      %s32 = sphi 0, %s29
      %s33 = sphi 0, %s32
      %s49 = sphi 0, %s33
      %s55 = sphi 0, %s57
      %s58 = sphi 0, %s55
      %s59 = sphi 0, %s58
      %s75 = sphi 0, %s59
      %s79 = sphi 0, %s79
      %s81 = sphi 0, %s79
      %s82 = sphi 0, %s81
      %s96 = sphi 0, %s82
      %s100 = sphi 0, %s100
      %s102 = sphi 0, %s100
      %s103 = sphi 0, %s102
      %s117 = sphi 0, %s103
      %s123 = sphi 0, %s125
      %s126 = sphi 0, %s123
      %s127 = sphi 0, %s126
      %s143 = sphi 0, %s127
    $region4: #{tpu_custom_call.1} parent=1 // loop_header_branch
      %22 = sbr.rel (%p20) target = $region8
    $region5: #{tpu_custom_call.1} parent=1 // loop_body
      %s24 = ssub.s32 %s19, 1
      %s25 = ssub.s32 %s19, 2
      %s26 = sadd.s32 %s19, 1
      %s27 = ssub.s32 %s19, %s26
      %p28 = scmp.eq.s32.totalorder %s27, 0
      %s30 = sadd.s32 %s29, 1
      %s31 = scalar_select %p28, %s29, %s30
      %p34 = pneg %p28
      %p35 = scmp.eq.s32.totalorder %s19, 3
      %p36 = por %p34, %p35
      %p37 = scmp.ne.s32.totalorder %s29, %s32
      %p38 = scmp.eq.s32.totalorder %s19, 0
      %p39 = por %p37, %p38
      %p40 = scmp.ne.s32.totalorder %s29, %s32
      %p41 = scmp.eq.s32.totalorder %s24, 3
      %p42 = por %p40, %p41
      %p43 = scmp.ne.s32.totalorder %s32, %s33
      %p44 = scmp.eq.s32.totalorder %s24, 0
      %p45 = por %p43, %p44
      %p46 = scmp.ne.s32.totalorder %s32, %s33
      %p47 = scmp.eq.s32.totalorder %s25, 3
      %p48 = por %p46, %p47
      %p50 = scmp.ne.s32.totalorder %s33, %s49
      %p51 = scmp.eq.s32.totalorder %s25, 0
      %p52 = por %p50, %p51
      %s53 = ssub.s32 %s19, %s26
      %p54 = scmp.eq.s32.totalorder %s53, 0
      %s56 = sadd.s32 %s55, 1
      %s57 = scalar_select %p54, %s55, %s56
      %p60 = pneg %p54
      %p61 = scmp.eq.s32.totalorder %s19, 3
      %p62 = por %p60, %p61
      %p63 = scmp.ne.s32.totalorder %s55, %s58
      %p64 = scmp.eq.s32.totalorder %s19, 0
      %p65 = por %p63, %p64
      %p66 = scmp.ne.s32.totalorder %s55, %s58
      %p67 = scmp.eq.s32.totalorder %s24, 3
      %p68 = por %p66, %p67
      %p69 = scmp.ne.s32.totalorder %s58, %s59
      %p70 = scmp.eq.s32.totalorder %s24, 0
      %p71 = por %p69, %p70
      %p72 = scmp.ne.s32.totalorder %s58, %s59
      %p73 = scmp.eq.s32.totalorder %s25, 3
      %p74 = por %p72, %p73
      %p76 = scmp.ne.s32.totalorder %s59, %s75
      %p77 = scmp.eq.s32.totalorder %s25, 0
      %p78 = por %p76, %p77
      %s80 = sadd.s32 %s79, 1
      %p83 = scmp.eq.s32.totalorder %s19, 3
      %p84 = scmp.ne.s32.totalorder %s79, %s81
      %p85 = scmp.eq.s32.totalorder %s19, 0
      %p86 = por %p84, %p85
      %p87 = scmp.ne.s32.totalorder %s79, %s81
      %p88 = scmp.eq.s32.totalorder %s24, 3
      %p89 = por %p87, %p88
      %p90 = scmp.ne.s32.totalorder %s81, %s82
      %p91 = scmp.eq.s32.totalorder %s24, 0
      %p92 = por %p90, %p91
      %p93 = scmp.ne.s32.totalorder %s81, %s82
      %p94 = scmp.eq.s32.totalorder %s25, 3
      %p95 = por %p93, %p94
      %p97 = scmp.ne.s32.totalorder %s82, %s96
      %p98 = scmp.eq.s32.totalorder %s25, 0
      %p99 = por %p97, %p98
      %s101 = sadd.s32 %s100, 1
      %p104 = scmp.eq.s32.totalorder %s19, 3
      %p105 = scmp.ne.s32.totalorder %s100, %s102
      %p106 = scmp.eq.s32.totalorder %s19, 0
      %p107 = por %p105, %p106
      %p108 = scmp.ne.s32.totalorder %s100, %s102
      %p109 = scmp.eq.s32.totalorder %s24, 3
      %p110 = por %p108, %p109
      %p111 = scmp.ne.s32.totalorder %s102, %s103
      %p112 = scmp.eq.s32.totalorder %s24, 0
      %p113 = por %p111, %p112
      %p114 = scmp.ne.s32.totalorder %s102, %s103
      %p115 = scmp.eq.s32.totalorder %s25, 3
      %p116 = por %p114, %p115
      %p118 = scmp.ne.s32.totalorder %s103, %s117
      %p119 = scmp.eq.s32.totalorder %s25, 0
      %p120 = por %p118, %p119
      %s121 = ssub.s32 %s19, %s26
      %p122 = scmp.eq.s32.totalorder %s121, 0
      %s124 = sadd.s32 %s123, 1
      %s125 = scalar_select %p122, %s123, %s124
      %p128 = pneg %p122
      %p129 = scmp.eq.s32.totalorder %s19, 3
      %p130 = por %p128, %p129
      %p131 = scmp.ne.s32.totalorder %s123, %s126
      %p132 = scmp.eq.s32.totalorder %s19, 0
      %p133 = por %p131, %p132
      %p134 = scmp.ne.s32.totalorder %s123, %s126
      %p135 = scmp.eq.s32.totalorder %s24, 3
      %p136 = por %p134, %p135
      %p137 = scmp.ne.s32.totalorder %s126, %s127
      %p138 = scmp.eq.s32.totalorder %s24, 0
      %p139 = por %p137, %p138
      %p140 = scmp.ne.s32.totalorder %s126, %s127
      %p141 = scmp.eq.s32.totalorder %s25, 3
      %p142 = por %p140, %p141
      %p144 = scmp.ne.s32.totalorder %s127, %s143
      %p145 = scmp.eq.s32.totalorder %s25, 0
      %p146 = por %p144, %p145
      %p147 = scmp.le.s32.totalorder 1, %s19
      %p148 = scmp.lt.s32.totalorder %s19, 5
      %p149 = pnand %p147, %p148
      %p150 = pneg %p149
      // Predicated region
      $region9: #{tpu_custom_call.1} parent=5 // pred_check
        _
      $region10: #{tpu_custom_call.1} parent=5 // pred_check_branch
        %152 = sbr.rel (%p149) target = $region12
      $region11: #{tpu_custom_call.1} parent=5 // pred_region
        %s153 = ssub.s32 %s19, 1
        // Predicated region
        $region13: #{tpu_custom_call.1} parent=11 // pred_check
          %p154 = pneg %p92
        $region14: #{tpu_custom_call.1} parent=11 // pred_check_branch
          %156 = sbr.rel (%p154) target = $region16
        $region15: #{tpu_custom_call.1} parent=11 // pred_region
          %s158 = ssub.s32 4096, 4096
          %159 = vsyncadd [#allocation6], %s158
          %s160 = sshll.u32 [#allocation7], 4
          %s161 = int_to_ptr.vmem [resolvable:$true] %s160
          %166 = dma.hbm_to_vmem [thread:$0]  %s2, 4096, %s161, [#allocation6], 64, 64, 4
        $region16: #{tpu_custom_call.1} parent=11 // pred_fallthru
          _
        // Predicated region
        $region17: #{tpu_custom_call.1} parent=11 // pred_check
          %p167 = pneg %p113
        $region18: #{tpu_custom_call.1} parent=11 // pred_check_branch
          %169 = sbr.rel (%p167) target = $region20
        $region19: #{tpu_custom_call.1} parent=11 // pred_region
          _
        $region20: #{tpu_custom_call.1} parent=11 // pred_fallthru
          _
      $region12: #{tpu_custom_call.1} parent=5 // pred_fallthru
        _
      %p170 = scmp.lt.s32.totalorder %s19, 4
      // Predicated region
      $region21: #{tpu_custom_call.1} parent=5 // pred_check
        %p171 = pneg %p170
      $region22: #{tpu_custom_call.1} parent=5 // pred_check_branch
        %173 = sbr.rel (%p171) target = $region24
      $region23: #{tpu_custom_call.1} parent=5 // pred_region
        // Predicated region
        $region25: #{tpu_custom_call.1} parent=23 // pred_check
          %p174 = pneg %p39
        $region26: #{tpu_custom_call.1} parent=23 // pred_check_branch
          %176 = sbr.rel (%p174) target = $region28
        $region27: #{tpu_custom_call.1} parent=23 // pred_region
          %s177 = sand.u32 %s29, 1
          %s178 = scalar_lea.sflag [#allocation3], %s177
          %s179 = sand.u32 %s29, 1
          %s180 = smul.addr %s179, 128
          %s181 = scalar_lea.vmem [#allocation2], %s180
          %s183 = ssub.s32 2048, 2048
          %184 = vsyncadd %s178, %s183
          %s185 = smul.addr %s19, 32
          %s186 = smul.addr %s185, 64
          %s187 = scalar_lea.hbm %s0, %s186
          %s188 = sshll.u32 %s181, 4
          %s189 = int_to_ptr.vmem [resolvable:$true] %s188
          %194 = dma.hbm_to_vmem [thread:$0]  %s187, 2048, %s189, %s178, 64, 64, 4
        $region28: #{tpu_custom_call.1} parent=23 // pred_fallthru
          _
        // Predicated region
        $region29: #{tpu_custom_call.1} parent=23 // pred_check
          %p195 = pneg %p65
        $region30: #{tpu_custom_call.1} parent=23 // pred_check_branch
          %197 = sbr.rel (%p195) target = $region32
        $region31: #{tpu_custom_call.1} parent=23 // pred_region
          %s198 = sand.u32 %s19, 1
          %s199 = scalar_lea.sflag [#allocation6], %s198
          %s200 = sand.u32 %s55, 1
          %s201 = smul.addr %s200, 256
          %s202 = scalar_lea.vmem [#allocation5], %s201
          %s204 = ssub.s32 4096, 4096
          %205 = vsyncadd %s199, %s204
          %s206 = smul.addr %s19, 64
          %s207 = smul.addr %s206, 64
          %s208 = scalar_lea.hbm %s1, %s207
          %s209 = sshll.u32 %s202, 4
          %s210 = int_to_ptr.vmem [resolvable:$true] %s209
          %215 = dma.hbm_to_vmem [thread:$0]  %s208, 4096, %s210, %s199, 128, 128, 8
        $region32: #{tpu_custom_call.1} parent=23 // pred_fallthru
          _
      $region24: #{tpu_custom_call.1} parent=5 // pred_fallthru
        _
      %p216 = scmp.le.s32.totalorder 1, %s19
      %p217 = scmp.lt.s32.totalorder %s19, 5
      %p218 = pnand %p216, %p217
      %p219 = pneg %p218
      // Predicated region
      $region33: #{tpu_custom_call.1} parent=5 // pred_check
        _
      $region34: #{tpu_custom_call.1} parent=5 // pred_check_branch
        %221 = sbr.rel (%p218) target = $region36
      $region35: #{tpu_custom_call.1} parent=5 // pred_region
        %s222 = ssub.s32 %s19, 1
        %s223 = sand.u32 %s32, 1
        %s224 = scalar_lea.sflag [#allocation3], %s223
        %s225 = sand.u32 %s32, 1
        %s226 = smul.addr %s225, 128
        %s227 = scalar_lea.vmem [#allocation2], %s226
        // Predicated region
        $region37: #{tpu_custom_call.1} parent=35 // pred_check
          %p228 = pneg %p45
        $region38: #{tpu_custom_call.1} parent=35 // pred_check_branch
          %230 = sbr.rel (%p228) target = $region40
        $region39: #{tpu_custom_call.1} parent=35 // pred_region
          %231 = dma.done %s224, 2048
        $region40: #{tpu_custom_call.1} parent=35 // pred_fallthru
          _
        %s232 = sand.u32 %s24, 1
        %s233 = scalar_lea.sflag [#allocation6], %s232
        %s234 = sand.u32 %s58, 1
        %s235 = smul.addr %s234, 256
        %s236 = scalar_lea.vmem [#allocation5], %s235
        // Predicated region
        $region41: #{tpu_custom_call.1} parent=35 // pred_check
          %p237 = pneg %p71
        $region42: #{tpu_custom_call.1} parent=35 // pred_check_branch
          %239 = sbr.rel (%p237) target = $region44
        $region43: #{tpu_custom_call.1} parent=35 // pred_region
          %240 = dma.done %s233, 4096
        $region44: #{tpu_custom_call.1} parent=35 // pred_fallthru
          _
        // Predicated region
        $region45: #{tpu_custom_call.1} parent=35 // pred_check
          %p241 = pneg %p92
        $region46: #{tpu_custom_call.1} parent=35 // pred_check_branch
          %243 = sbr.rel (%p241) target = $region48
        $region47: #{tpu_custom_call.1} parent=35 // pred_region
          %244 = dma.done [#allocation6], 4096
        $region48: #{tpu_custom_call.1} parent=35 // pred_fallthru
          _
        %s245 = sand.u32 %s32, 1
        %s246 = scalar_lea.sflag [#allocation3], %s245
        %s247 = sand.u32 %s32, 1
        %s248 = smul.addr %s247, 128
        %s249 = scalar_lea.vmem [#allocation2], %s248
        %p250 = pneg %p45
        %p251 = pneg %p42
        %s252 = sand.u32 %s24, 1
        %s253 = scalar_lea.sflag [#allocation6], %s252
        %s254 = sand.u32 %s58, 1
        %s255 = smul.addr %s254, 256
        %s256 = scalar_lea.vmem [#allocation5], %s255
        %p257 = pneg %p71
        %p258 = pneg %p68
        %p259 = pneg %p92
        %p260 = pneg %p89
        %p261 = pneg %p113
        %p262 = pneg %p110
        %p263 = pneg %p139
        %p264 = pneg %p136
        %s265 = sand.u32 %s126, 1
        %s266 = scalar_lea.sflag [#allocation4], %s265
        %s267 = sand.u32 %s126, 1
        %s268 = smul.addr %s267, 16
        %s269 = scalar_lea.vmem [#allocation8], %s268
        %v271 = vld [vmem:[%s236] sm:$0xff]
        %v272 = vld [vmem:[%s236 + $0x8] sm:$0xff]
        %v273 = vld [vmem:[%s236 + $0x10] sm:$0xff]
        %v274 = vld [vmem:[%s236 + $0x18] sm:$0xff]
        %v275 = vld [vmem:[%s236 + $0x20] sm:$0xff]
        %v276 = vld [vmem:[%s236 + $0x28] sm:$0xff]
        %v277 = vld [vmem:[%s236 + $0x30] sm:$0xff]
        %v278 = vld [vmem:[%s236 + $0x38] sm:$0xff]
        %v279 = vld [vmem:[%s236 + $0x40] sm:$0xff]
        %v280 = vld [vmem:[%s236 + $0x48] sm:$0xff]
        %v281 = vld [vmem:[%s236 + $0x50] sm:$0xff]
        %v282 = vld [vmem:[%s236 + $0x58] sm:$0xff]
        %v283 = vld [vmem:[%s236 + $0x60] sm:$0xff]
        %v284 = vld [vmem:[%s236 + $0x68] sm:$0xff]
        %v285 = vld [vmem:[%s236 + $0x70] sm:$0xff]
        %v286 = vld [vmem:[%s236 + $0x78] sm:$0xff]
        %v287 = vld [vmem:[%s236 + $0x80] sm:$0xff]
        %v288 = vld [vmem:[%s236 + $0x88] sm:$0xff]
        %v289 = vld [vmem:[%s236 + $0x90] sm:$0xff]
        %v290 = vld [vmem:[%s236 + $0x98] sm:$0xff]
        %v291 = vld [vmem:[%s236 + $0xa0] sm:$0xff]
        %v292 = vld [vmem:[%s236 + $0xa8] sm:$0xff]
        %v293 = vld [vmem:[%s236 + $0xb0] sm:$0xff]
        %v294 = vld [vmem:[%s236 + $0xb8] sm:$0xff]
        %v295 = vld [vmem:[%s236 + $0xc0] sm:$0xff]
        %v296 = vld [vmem:[%s236 + $0xc8] sm:$0xff]
        %v297 = vld [vmem:[%s236 + $0xd0] sm:$0xff]
        %v298 = vld [vmem:[%s236 + $0xd8] sm:$0xff]
        %v299 = vld [vmem:[%s236 + $0xe0] sm:$0xff]
        %v300 = vld [vmem:[%s236 + $0xe8] sm:$0xff]
        %v301 = vld [vmem:[%s236 + $0xf0] sm:$0xff]
        %v302 = vld [vmem:[%s236 + $0xf8] sm:$0xff]
        %v303 = vld [vmem:[%s227] sm:$0xf]
        %v304 = vld [vmem:[%s227 + $0x4] sm:$0xf]
        %v305 = vld [vmem:[%s227 + $0x8] sm:$0xf]
        %v306 = vld [vmem:[%s227 + $0xc] sm:$0xf]
        %v307 = vld [vmem:[%s227 + $0x10] sm:$0xf]
        %v308 = vld [vmem:[%s227 + $0x14] sm:$0xf]
        %v309 = vld [vmem:[%s227 + $0x18] sm:$0xf]
        %v310 = vld [vmem:[%s227 + $0x1c] sm:$0xf]
        %v311 = vld [vmem:[%s227 + $0x20] sm:$0xf]
        %v312 = vld [vmem:[%s227 + $0x24] sm:$0xf]
        %v313 = vld [vmem:[%s227 + $0x28] sm:$0xf]
        %v314 = vld [vmem:[%s227 + $0x2c] sm:$0xf]
        %v315 = vld [vmem:[%s227 + $0x30] sm:$0xf]
        %v316 = vld [vmem:[%s227 + $0x34] sm:$0xf]
        %v317 = vld [vmem:[%s227 + $0x38] sm:$0xf]
        %v318 = vld [vmem:[%s227 + $0x3c] sm:$0xf]
        %v319 = vld [vmem:[%s227 + $0x40] sm:$0xf]
        %v320 = vld [vmem:[%s227 + $0x44] sm:$0xf]
        %v321 = vld [vmem:[%s227 + $0x48] sm:$0xf]
        %v322 = vld [vmem:[%s227 + $0x4c] sm:$0xf]
        %v323 = vld [vmem:[%s227 + $0x50] sm:$0xf]
        %v324 = vld [vmem:[%s227 + $0x54] sm:$0xf]
        %v325 = vld [vmem:[%s227 + $0x58] sm:$0xf]
        %v326 = vld [vmem:[%s227 + $0x5c] sm:$0xf]
        %v327 = vld [vmem:[%s227 + $0x60] sm:$0xf]
        %v328 = vld [vmem:[%s227 + $0x64] sm:$0xf]
        %v329 = vld [vmem:[%s227 + $0x68] sm:$0xf]
        %v330 = vld [vmem:[%s227 + $0x6c] sm:$0xf]
        %v331 = vld [vmem:[%s227 + $0x70] sm:$0xf]
        %v332 = vld [vmem:[%s227 + $0x74] sm:$0xf]
        %v333 = vld [vmem:[%s227 + $0x78] sm:$0xf]
        %v334 = vld [vmem:[%s227 + $0x7c] sm:$0xf]
        %v335 = vld [vmem:[#allocation7] sm:$0xf]
        %v336 = vld [vmem:[#allocation7 + $0x4] sm:$0xf]
        %v337 = vld [vmem:[#allocation7 + $0x8] sm:$0xf]
        %v338 = vld [vmem:[#allocation7 + $0xc] sm:$0xf]
        %v339 = vld [vmem:[#allocation7 + $0x10] sm:$0xf]
        %v340 = vld [vmem:[#allocation7 + $0x14] sm:$0xf]
        %v341 = vld [vmem:[#allocation7 + $0x18] sm:$0xf]
        %v342 = vld [vmem:[#allocation7 + $0x1c] sm:$0xf]
        %v343 = vld [vmem:[#allocation7 + $0x20] sm:$0xf]
        %v344 = vld [vmem:[#allocation7 + $0x24] sm:$0xf]
        %v345 = vld [vmem:[#allocation7 + $0x28] sm:$0xf]
        %v346 = vld [vmem:[#allocation7 + $0x2c] sm:$0xf]
        %v347 = vld [vmem:[#allocation7 + $0x30] sm:$0xf]
        %v348 = vld [vmem:[#allocation7 + $0x34] sm:$0xf]
        %v349 = vld [vmem:[#allocation7 + $0x38] sm:$0xf]
        %v350 = vld [vmem:[#allocation7 + $0x3c] sm:$0xf]
        %v351 = vld [vmem:[%s3] sm:$0x1]
        %v352 = vlaneseq
        %v353 = vshrl.u32 %v352, 7
        %v354 = vsub.s32 0, %v353
        %v355 = vrot.slane %v351, %v354
        %v388 = vunpack.c.l.b16 %v303
        %v389 = vunpack.c.l.b16 %v304
        %v390 = vunpack.c.l.b16 %v305
        %v391 = vunpack.c.l.b16 %v306
        %v392 = vunpack.c.l.b16 %v307
        %v393 = vunpack.c.l.b16 %v308
        %v394 = vunpack.c.l.b16 %v309
        %v395 = vunpack.c.l.b16 %v310
        %v396 = vunpack.c.l.b16 %v311
        %v397 = vunpack.c.l.b16 %v312
        %v398 = vunpack.c.l.b16 %v313
        %v399 = vunpack.c.l.b16 %v314
        %v400 = vunpack.c.l.b16 %v315
        %v401 = vunpack.c.l.b16 %v316
        %v402 = vunpack.c.l.b16 %v317
        %v403 = vunpack.c.l.b16 %v318
        %v404 = vunpack.c.l.b16 %v319
        %v405 = vunpack.c.l.b16 %v320
        %v406 = vunpack.c.l.b16 %v321
        %v407 = vunpack.c.l.b16 %v322
        %v408 = vunpack.c.l.b16 %v323
        %v409 = vunpack.c.l.b16 %v324
        %v410 = vunpack.c.l.b16 %v325
        %v411 = vunpack.c.l.b16 %v326
        %v412 = vunpack.c.l.b16 %v327
        %v413 = vunpack.c.l.b16 %v328
        %v414 = vunpack.c.l.b16 %v329
        %v415 = vunpack.c.l.b16 %v330
        %v416 = vunpack.c.l.b16 %v331
        %v417 = vunpack.c.l.b16 %v332
        %v418 = vunpack.c.l.b16 %v333
        %v419 = vunpack.c.l.b16 %v334
        %v420 = vpack.c.b16 %v389, %v388
        %v421 = vpack.c.b16 %v391, %v390
        %v422 = vpack.c.b16 %v393, %v392
        %v423 = vpack.c.b16 %v395, %v394
        %v424 = vpack.c.b16 %v397, %v396
        %v425 = vpack.c.b16 %v399, %v398
        %v426 = vpack.c.b16 %v401, %v400
        %v427 = vpack.c.b16 %v403, %v402
        %v428 = vpack.c.b16 %v405, %v404
        %v429 = vpack.c.b16 %v407, %v406
        %v430 = vpack.c.b16 %v409, %v408
        %v431 = vpack.c.b16 %v411, %v410
        %v432 = vpack.c.b16 %v413, %v412
        %v433 = vpack.c.b16 %v415, %v414
        %v434 = vpack.c.b16 %v417, %v416
        %v435 = vpack.c.b16 %v419, %v418
        %v468 = vunpack.c.l.b16 %v335
        %v469 = vunpack.c.l.b16 %v336
        %v470 = vunpack.c.l.b16 %v337
        %v471 = vunpack.c.l.b16 %v338
        %v472 = vunpack.c.l.b16 %v339
        %v473 = vunpack.c.l.b16 %v340
        %v474 = vunpack.c.l.b16 %v341
        %v475 = vunpack.c.l.b16 %v342
        %v476 = vunpack.c.l.b16 %v343
        %v477 = vunpack.c.l.b16 %v344
        %v478 = vunpack.c.l.b16 %v345
        %v479 = vunpack.c.l.b16 %v346
        %v480 = vunpack.c.l.b16 %v347
        %v481 = vunpack.c.l.b16 %v348
        %v482 = vunpack.c.l.b16 %v349
        %v483 = vunpack.c.l.b16 %v350
        %v484 = vpack.c.b16 %v469, %v468
        %v485 = vpack.c.b16 %v471, %v470
        %v486 = vpack.c.b16 %v473, %v472
        %v487 = vpack.c.b16 %v475, %v474
        %v488 = vpack.c.b16 %v477, %v476
        %v489 = vpack.c.b16 %v479, %v478
        %v490 = vpack.c.b16 %v481, %v480
        %v491 = vpack.c.b16 %v483, %v482
        %500 = vmatprep.subr.bf16.mxu0 0
        %501 = vmatpush1.bf16.msra.mxu0 %v484
        %502 = vmatprep.subr.bf16.mxu0 0
        %503 = vmatpush1.bf16.msra.mxu0 %v485
        %504 = vmatprep.subr.bf16.mxu0 0
        %505 = vmatpush1.bf16.msra.mxu0 %v486
        %506 = vmatprep.subr.bf16.mxu0 0
        %507 = vmatpush1.bf16.msra.mxu0 %v487
        %508 = vmatprep.subr.bf16.mxu0 0
        %509 = vmatpush1.bf16.msra.mxu0 %v488
        %510 = vmatprep.subr.bf16.mxu0 0
        %511 = vmatpush1.bf16.msra.mxu0 %v489
        %512 = vmatprep.subr.bf16.mxu0 0
        %513 = vmatpush1.bf16.msra.mxu0 %v490
        %514 = vmatprep.subr.bf16.mxu0 0
        %515 = vmatpush1.bf16.msra.mxu0 %v491
        %516 = vmatprep.subr.bf16.mxu0 0
        %517 = vmatpush1.bf16.msra.mxu0 0
        %518 = vmatprep.subr.bf16.mxu0 0
        %519 = vmatpush1.bf16.msra.mxu0 0
        %520 = vmatprep.subr.bf16.mxu0 0
        %521 = vmatpush1.bf16.msra.mxu0 0
        %522 = vmatprep.subr.bf16.mxu0 0
        %523 = vmatpush1.bf16.msra.mxu0 0
        %524 = vmatprep.subr.bf16.mxu0 0
        %525 = vmatpush1.bf16.msra.mxu0 0
        %526 = vmatprep.subr.bf16.mxu0 0
        %527 = vmatpush1.bf16.msra.mxu0 0
        %528 = vmatprep.subr.bf16.mxu0 0
        %529 = vmatpush1.bf16.msra.mxu0 0
        %530 = vmatprep.subr.bf16.mxu0 0
        %531 = vmatpush1.bf16.msra.mxu0 0
        %532 = vmatprep.mubr.bf16.mxu0 0
        %533 = vmatmul.mubr.bf16.gmra.mrb[0].mxu0 %v420
        %v534 = vpop.f32.mrb[0].mxu0
        %v535 = vadd.f32 %v355, %v534
        %v536 = vpop.f32.mrb[0].mxu0
        %v537 = vpop.f32.mrb[0].mxu0
        %v538 = vadd.f32 %v355, %v537
        %v539 = vpop.f32.mrb[0].mxu0
        %540 = vmatprep.mubr.bf16.mxu0 0
        %541 = vmatmul.mubr.bf16.gmra.mrb[0].mxu0 %v421
        %v542 = vpop.f32.mrb[0].mxu0
        %v543 = vadd.f32 %v355, %v542
        %v544 = vpop.f32.mrb[0].mxu0
        %v545 = vpop.f32.mrb[0].mxu0
        %v546 = vadd.f32 %v355, %v545
        %v547 = vpop.f32.mrb[0].mxu0
        %548 = vmatprep.mubr.bf16.mxu0 0
        %549 = vmatmul.mubr.bf16.gmra.mrb[0].mxu0 %v422
        %v550 = vpop.f32.mrb[0].mxu0
        %v551 = vadd.f32 %v355, %v550
        %v552 = vpop.f32.mrb[0].mxu0
        %v553 = vpop.f32.mrb[0].mxu0
        %v554 = vadd.f32 %v355, %v553
        %v555 = vpop.f32.mrb[0].mxu0
        %556 = vmatprep.mubr.bf16.mxu0 0
        %557 = vmatmul.mubr.bf16.gmra.mrb[0].mxu0 %v423
        %v558 = vpop.f32.mrb[0].mxu0
        %v559 = vadd.f32 %v355, %v558
        %v560 = vpop.f32.mrb[0].mxu0
        %v561 = vpop.f32.mrb[0].mxu0
        %v562 = vadd.f32 %v355, %v561
        %v563 = vpop.f32.mrb[0].mxu0
        %564 = vmatprep.mubr.bf16.mxu0 0
        %565 = vmatmul.mubr.bf16.gmra.mrb[0].mxu0 %v424
        %v566 = vpop.f32.mrb[0].mxu0
        %v567 = vadd.f32 %v355, %v566
        %v568 = vpop.f32.mrb[0].mxu0
        %v569 = vpop.f32.mrb[0].mxu0
        %v570 = vadd.f32 %v355, %v569
        %v571 = vpop.f32.mrb[0].mxu0
        %572 = vmatprep.mubr.bf16.mxu0 0
        %573 = vmatmul.mubr.bf16.gmra.mrb[0].mxu0 %v425
        %v574 = vpop.f32.mrb[0].mxu0
        %v575 = vadd.f32 %v355, %v574
        %v576 = vpop.f32.mrb[0].mxu0
        %v577 = vpop.f32.mrb[0].mxu0
        %v578 = vadd.f32 %v355, %v577
        %v579 = vpop.f32.mrb[0].mxu0
        %580 = vmatprep.mubr.bf16.mxu0 0
        %581 = vmatmul.mubr.bf16.gmra.mrb[0].mxu0 %v426
        %v582 = vpop.f32.mrb[0].mxu0
        %v583 = vadd.f32 %v355, %v582
        %v584 = vpop.f32.mrb[0].mxu0
        %v585 = vpop.f32.mrb[0].mxu0
        %v586 = vadd.f32 %v355, %v585
        %v587 = vpop.f32.mrb[0].mxu0
        %588 = vmatprep.mubr.bf16.mxu0 0
        %589 = vmatmul.mubr.bf16.gmra.mrb[0].mxu0 %v427
        %v590 = vpop.f32.mrb[0].mxu0
        %v591 = vadd.f32 %v355, %v590
        %v592 = vpop.f32.mrb[0].mxu0
        %v593 = vpop.f32.mrb[0].mxu0
        %v594 = vadd.f32 %v355, %v593
        %v595 = vpop.f32.mrb[0].mxu0
        %596 = vmatprep.mubr.bf16.mxu0 0
        %597 = vmatmul.mubr.bf16.gmra.mrb[0].mxu0 %v428
        %v598 = vpop.f32.mrb[0].mxu0
        %v599 = vadd.f32 %v355, %v598
        %v600 = vpop.f32.mrb[0].mxu0
        %v601 = vpop.f32.mrb[0].mxu0
        %v602 = vadd.f32 %v355, %v601
        %v603 = vpop.f32.mrb[0].mxu0
        %604 = vmatprep.mubr.bf16.mxu0 0
        %605 = vmatmul.mubr.bf16.gmra.mrb[0].mxu0 %v429
        %v606 = vpop.f32.mrb[0].mxu0
        %v607 = vadd.f32 %v355, %v606
        %v608 = vpop.f32.mrb[0].mxu0
        %v609 = vpop.f32.mrb[0].mxu0
        %v610 = vadd.f32 %v355, %v609
        %v611 = vpop.f32.mrb[0].mxu0
        %612 = vmatprep.mubr.bf16.mxu0 0
        %613 = vmatmul.mubr.bf16.gmra.mrb[0].mxu0 %v430
        %v614 = vpop.f32.mrb[0].mxu0
        %v615 = vadd.f32 %v355, %v614
        %v616 = vpop.f32.mrb[0].mxu0
        %v617 = vpop.f32.mrb[0].mxu0
        %v618 = vadd.f32 %v355, %v617
        %v619 = vpop.f32.mrb[0].mxu0
        %620 = vmatprep.mubr.bf16.mxu0 0
        %621 = vmatmul.mubr.bf16.gmra.mrb[0].mxu0 %v431
        %v622 = vpop.f32.mrb[0].mxu0
        %v623 = vadd.f32 %v355, %v622
        %v624 = vpop.f32.mrb[0].mxu0
        %v625 = vpop.f32.mrb[0].mxu0
        %v626 = vadd.f32 %v355, %v625
        %v627 = vpop.f32.mrb[0].mxu0
        %628 = vmatprep.mubr.bf16.mxu0 0
        %629 = vmatmul.mubr.bf16.gmra.mrb[0].mxu0 %v432
        %v630 = vpop.f32.mrb[0].mxu0
        %v631 = vadd.f32 %v355, %v630
        %v632 = vpop.f32.mrb[0].mxu0
        %v633 = vpop.f32.mrb[0].mxu0
        %v634 = vadd.f32 %v355, %v633
        %v635 = vpop.f32.mrb[0].mxu0
        %636 = vmatprep.mubr.bf16.mxu0 0
        %637 = vmatmul.mubr.bf16.gmra.mrb[0].mxu0 %v433
        %v638 = vpop.f32.mrb[0].mxu0
        %v639 = vadd.f32 %v355, %v638
        %v640 = vpop.f32.mrb[0].mxu0
        %v641 = vpop.f32.mrb[0].mxu0
        %v642 = vadd.f32 %v355, %v641
        %v643 = vpop.f32.mrb[0].mxu0
        %644 = vmatprep.mubr.bf16.mxu0 0
        %645 = vmatmul.mubr.bf16.gmra.mrb[0].mxu0 %v434
        %v646 = vpop.f32.mrb[0].mxu0
        %v647 = vadd.f32 %v355, %v646
        %v648 = vpop.f32.mrb[0].mxu0
        %v649 = vpop.f32.mrb[0].mxu0
        %v650 = vadd.f32 %v355, %v649
        %v651 = vpop.f32.mrb[0].mxu0
        %652 = vmatprep.mubr.bf16.mxu0 0
        %653 = vmatmul.mubr.bf16.gmra.mrb[0].mxu0 %v435
        %v654 = vpop.f32.mrb[0].mxu0
        %v655 = vadd.f32 %v355, %v654
        %v656 = vpop.f32.mrb[0].mxu0
        %v657 = vpop.f32.mrb[0].mxu0
        %v658 = vadd.f32 %v355, %v657
        %v659 = vpop.f32.mrb[0].mxu0
        %660 = vdwg.mxu0
        %v661 = vpack.c.bf16 %v538, %v535
        %v662 = vpack.c.bf16 %v546, %v543
        %v663 = vpack.c.bf16 %v554, %v551
        %v664 = vpack.c.bf16 %v562, %v559
        %v665 = vpack.c.bf16 %v570, %v567
        %v666 = vpack.c.bf16 %v578, %v575
        %v667 = vpack.c.bf16 %v586, %v583
        %v668 = vpack.c.bf16 %v594, %v591
        %v669 = vpack.c.bf16 %v602, %v599
        %v670 = vpack.c.bf16 %v610, %v607
        %v671 = vpack.c.bf16 %v618, %v615
        %v672 = vpack.c.bf16 %v626, %v623
        %v673 = vpack.c.bf16 %v634, %v631
        %v674 = vpack.c.bf16 %v642, %v639
        %v675 = vpack.c.bf16 %v650, %v647
        %v676 = vpack.c.bf16 %v658, %v655
        %s677 = scalar_lea.vmem [#allocation7], 64
        %v678 = vld [vmem:[%s677] sm:$0xf]
        %v679 = vld [vmem:[%s677 + $0x4] sm:$0xf]
        %v680 = vld [vmem:[%s677 + $0x8] sm:$0xf]
        %v681 = vld [vmem:[%s677 + $0xc] sm:$0xf]
        %v682 = vld [vmem:[%s677 + $0x10] sm:$0xf]
        %v683 = vld [vmem:[%s677 + $0x14] sm:$0xf]
        %v684 = vld [vmem:[%s677 + $0x18] sm:$0xf]
        %v685 = vld [vmem:[%s677 + $0x1c] sm:$0xf]
        %v686 = vld [vmem:[%s677 + $0x20] sm:$0xf]
        %v687 = vld [vmem:[%s677 + $0x24] sm:$0xf]
        %v688 = vld [vmem:[%s677 + $0x28] sm:$0xf]
        %v689 = vld [vmem:[%s677 + $0x2c] sm:$0xf]
        %v690 = vld [vmem:[%s677 + $0x30] sm:$0xf]
        %v691 = vld [vmem:[%s677 + $0x34] sm:$0xf]
        %v692 = vld [vmem:[%s677 + $0x38] sm:$0xf]
        %v693 = vld [vmem:[%s677 + $0x3c] sm:$0xf]
        %v710 = vunpack.c.l.b16 %v678
        %v711 = vunpack.c.l.b16 %v679
        %v712 = vunpack.c.l.b16 %v680
        %v713 = vunpack.c.l.b16 %v681
        %v714 = vunpack.c.l.b16 %v682
        %v715 = vunpack.c.l.b16 %v683
        %v716 = vunpack.c.l.b16 %v684
        %v717 = vunpack.c.l.b16 %v685
        %v718 = vunpack.c.l.b16 %v686
        %v719 = vunpack.c.l.b16 %v687
        %v720 = vunpack.c.l.b16 %v688
        %v721 = vunpack.c.l.b16 %v689
        %v722 = vunpack.c.l.b16 %v690
        %v723 = vunpack.c.l.b16 %v691
        %v724 = vunpack.c.l.b16 %v692
        %v725 = vunpack.c.l.b16 %v693
        %v726 = vpack.c.b16 %v711, %v710
        %v727 = vpack.c.b16 %v713, %v712
        %v728 = vpack.c.b16 %v715, %v714
        %v729 = vpack.c.b16 %v717, %v716
        %v730 = vpack.c.b16 %v719, %v718
        %v731 = vpack.c.b16 %v721, %v720
        %v732 = vpack.c.b16 %v723, %v722
        %v733 = vpack.c.b16 %v725, %v724
        %742 = vmatprep.subr.bf16.mxu0 0
        %743 = vmatpush1.bf16.msra.mxu0 %v726
        %744 = vmatprep.subr.bf16.mxu0 0
        %745 = vmatpush1.bf16.msra.mxu0 %v727
        %746 = vmatprep.subr.bf16.mxu0 0
        %747 = vmatpush1.bf16.msra.mxu0 %v728
        %748 = vmatprep.subr.bf16.mxu0 0
        %749 = vmatpush1.bf16.msra.mxu0 %v729
        %750 = vmatprep.subr.bf16.mxu0 0
        %751 = vmatpush1.bf16.msra.mxu0 %v730
        %752 = vmatprep.subr.bf16.mxu0 0
        %753 = vmatpush1.bf16.msra.mxu0 %v731
        %754 = vmatprep.subr.bf16.mxu0 0
        %755 = vmatpush1.bf16.msra.mxu0 %v732
        %756 = vmatprep.subr.bf16.mxu0 0
        %757 = vmatpush1.bf16.msra.mxu0 %v733
        %758 = vmatprep.subr.bf16.mxu0 0
        %759 = vmatpush1.bf16.msra.mxu0 0
        %760 = vmatprep.subr.bf16.mxu0 0
        %761 = vmatpush1.bf16.msra.mxu0 0
        %762 = vmatprep.subr.bf16.mxu0 0
        %763 = vmatpush1.bf16.msra.mxu0 0
        %764 = vmatprep.subr.bf16.mxu0 0
        %765 = vmatpush1.bf16.msra.mxu0 0
        %766 = vmatprep.subr.bf16.mxu0 0
        %767 = vmatpush1.bf16.msra.mxu0 0
        %768 = vmatprep.subr.bf16.mxu0 0
        %769 = vmatpush1.bf16.msra.mxu0 0
        %770 = vmatprep.subr.bf16.mxu0 0
        %771 = vmatpush1.bf16.msra.mxu0 0
        %772 = vmatprep.subr.bf16.mxu0 0
        %773 = vmatpush1.bf16.msra.mxu0 0
        %774 = vmatprep.mubr.bf16.mxu0 0
        %775 = vmatmul.mubr.bf16.gmra.mrb[0].mxu0 %v661
        %v776 = vpop.f32.mrb[0].mxu0
        %v777 = vadd.f32 0.0, %v776
        %v778 = vpop.f32.mrb[0].mxu0
        %v779 = vpop.f32.mrb[0].mxu0
        %v780 = vadd.f32 0.0, %v779
        %v781 = vpop.f32.mrb[0].mxu0
        %782 = vmatprep.mubr.bf16.mxu0 0
        %783 = vmatmul.mubr.bf16.gmra.mrb[0].mxu0 %v662
        %v784 = vpop.f32.mrb[0].mxu0
        %v785 = vadd.f32 0.0, %v784
        %v786 = vpop.f32.mrb[0].mxu0
        %v787 = vpop.f32.mrb[0].mxu0
        %v788 = vadd.f32 0.0, %v787
        %v789 = vpop.f32.mrb[0].mxu0
        %790 = vmatprep.mubr.bf16.mxu0 0
        %791 = vmatmul.mubr.bf16.gmra.mrb[0].mxu0 %v663
        %v792 = vpop.f32.mrb[0].mxu0
        %v793 = vadd.f32 0.0, %v792
        %v794 = vpop.f32.mrb[0].mxu0
        %v795 = vpop.f32.mrb[0].mxu0
        %v796 = vadd.f32 0.0, %v795
        %v797 = vpop.f32.mrb[0].mxu0
        %798 = vmatprep.mubr.bf16.mxu0 0
        %799 = vmatmul.mubr.bf16.gmra.mrb[0].mxu0 %v664
        %v800 = vpop.f32.mrb[0].mxu0
        %v801 = vadd.f32 0.0, %v800
        %v802 = vpop.f32.mrb[0].mxu0
        %v803 = vpop.f32.mrb[0].mxu0
        %v804 = vadd.f32 0.0, %v803
        %v805 = vpop.f32.mrb[0].mxu0
        %806 = vmatprep.mubr.bf16.mxu0 0
        %807 = vmatmul.mubr.bf16.gmra.mrb[0].mxu0 %v665
        %v808 = vpop.f32.mrb[0].mxu0
        %v809 = vadd.f32 0.0, %v808
        %v810 = vpop.f32.mrb[0].mxu0
        %v811 = vpop.f32.mrb[0].mxu0
        %v812 = vadd.f32 0.0, %v811
        %v813 = vpop.f32.mrb[0].mxu0
        %814 = vmatprep.mubr.bf16.mxu0 0
        %815 = vmatmul.mubr.bf16.gmra.mrb[0].mxu0 %v666
        %v816 = vpop.f32.mrb[0].mxu0
        %v817 = vadd.f32 0.0, %v816
        %v818 = vpop.f32.mrb[0].mxu0
        %v819 = vpop.f32.mrb[0].mxu0
        %v820 = vadd.f32 0.0, %v819
        %v821 = vpop.f32.mrb[0].mxu0
        %822 = vmatprep.mubr.bf16.mxu0 0
        %823 = vmatmul.mubr.bf16.gmra.mrb[0].mxu0 %v667
        %v824 = vpop.f32.mrb[0].mxu0
        %v825 = vadd.f32 0.0, %v824
        %v826 = vpop.f32.mrb[0].mxu0
        %v827 = vpop.f32.mrb[0].mxu0
        %v828 = vadd.f32 0.0, %v827
        %v829 = vpop.f32.mrb[0].mxu0
        %830 = vmatprep.mubr.bf16.mxu0 0
        %831 = vmatmul.mubr.bf16.gmra.mrb[0].mxu0 %v668
        %v832 = vpop.f32.mrb[0].mxu0
        %v833 = vadd.f32 0.0, %v832
        %v834 = vpop.f32.mrb[0].mxu0
        %v835 = vpop.f32.mrb[0].mxu0
        %v836 = vadd.f32 0.0, %v835
        %v837 = vpop.f32.mrb[0].mxu0
        %838 = vmatprep.mubr.bf16.mxu0 0
        %839 = vmatmul.mubr.bf16.gmra.mrb[0].mxu0 %v669
        %v840 = vpop.f32.mrb[0].mxu0
        %v841 = vadd.f32 0.0, %v840
        %v842 = vpop.f32.mrb[0].mxu0
        %v843 = vpop.f32.mrb[0].mxu0
        %v844 = vadd.f32 0.0, %v843
        %v845 = vpop.f32.mrb[0].mxu0
        %846 = vmatprep.mubr.bf16.mxu0 0
        %847 = vmatmul.mubr.bf16.gmra.mrb[0].mxu0 %v670
        %v848 = vpop.f32.mrb[0].mxu0
        %v849 = vadd.f32 0.0, %v848
        %v850 = vpop.f32.mrb[0].mxu0
        %v851 = vpop.f32.mrb[0].mxu0
        %v852 = vadd.f32 0.0, %v851
        %v853 = vpop.f32.mrb[0].mxu0
        %854 = vmatprep.mubr.bf16.mxu0 0
        %855 = vmatmul.mubr.bf16.gmra.mrb[0].mxu0 %v671
        %v856 = vpop.f32.mrb[0].mxu0
        %v857 = vadd.f32 0.0, %v856
        %v858 = vpop.f32.mrb[0].mxu0
        %v859 = vpop.f32.mrb[0].mxu0
        %v860 = vadd.f32 0.0, %v859
        %v861 = vpop.f32.mrb[0].mxu0
        %862 = vmatprep.mubr.bf16.mxu0 0
        %863 = vmatmul.mubr.bf16.gmra.mrb[0].mxu0 %v672
        %v864 = vpop.f32.mrb[0].mxu0
        %v865 = vadd.f32 0.0, %v864
        %v866 = vpop.f32.mrb[0].mxu0
        %v867 = vpop.f32.mrb[0].mxu0
        %v868 = vadd.f32 0.0, %v867
        %v869 = vpop.f32.mrb[0].mxu0
        %870 = vmatprep.mubr.bf16.mxu0 0
        %871 = vmatmul.mubr.bf16.gmra.mrb[0].mxu0 %v673
        %v872 = vpop.f32.mrb[0].mxu0
        %v873 = vadd.f32 0.0, %v872
        %v874 = vpop.f32.mrb[0].mxu0
        %v875 = vpop.f32.mrb[0].mxu0
        %v876 = vadd.f32 0.0, %v875
        %v877 = vpop.f32.mrb[0].mxu0
        %878 = vmatprep.mubr.bf16.mxu0 0
        %879 = vmatmul.mubr.bf16.gmra.mrb[0].mxu0 %v674
        %v880 = vpop.f32.mrb[0].mxu0
        %v881 = vadd.f32 0.0, %v880
        %v882 = vpop.f32.mrb[0].mxu0
        %v883 = vpop.f32.mrb[0].mxu0
        %v884 = vadd.f32 0.0, %v883
        %v885 = vpop.f32.mrb[0].mxu0
        %886 = vmatprep.mubr.bf16.mxu0 0
        %887 = vmatmul.mubr.bf16.gmra.mrb[0].mxu0 %v675
        %v888 = vpop.f32.mrb[0].mxu0
        %v889 = vadd.f32 0.0, %v888
        %v890 = vpop.f32.mrb[0].mxu0
        %v891 = vpop.f32.mrb[0].mxu0
        %v892 = vadd.f32 0.0, %v891
        %v893 = vpop.f32.mrb[0].mxu0
        %894 = vmatprep.mubr.bf16.mxu0 0
        %895 = vmatmul.mubr.bf16.gmra.mrb[0].mxu0 %v676
        %v896 = vpop.f32.mrb[0].mxu0
        %v897 = vadd.f32 0.0, %v896
        %v898 = vpop.f32.mrb[0].mxu0
        %v899 = vpop.f32.mrb[0].mxu0
        %v900 = vadd.f32 0.0, %v899
        %v901 = vpop.f32.mrb[0].mxu0
        %902 = vdwg.mxu0
        %v903 = vpack.c.bf16 %v780, %v777
        %v904 = vpack.c.bf16 %v788, %v785
        %v905 = vpack.c.bf16 %v796, %v793
        %v906 = vpack.c.bf16 %v804, %v801
        %v907 = vpack.c.bf16 %v812, %v809
        %v908 = vpack.c.bf16 %v820, %v817
        %v909 = vpack.c.bf16 %v828, %v825
        %v910 = vpack.c.bf16 %v836, %v833
        %v911 = vpack.c.bf16 %v844, %v841
        %v912 = vpack.c.bf16 %v852, %v849
        %v913 = vpack.c.bf16 %v860, %v857
        %v914 = vpack.c.bf16 %v868, %v865
        %v915 = vpack.c.bf16 %v876, %v873
        %v916 = vpack.c.bf16 %v884, %v881
        %v917 = vpack.c.bf16 %v892, %v889
        %v918 = vpack.c.bf16 %v900, %v897
        %v919 = vld [vmem:[%s3 + $0x1] sm:$0x1]
        %v920 = vlaneseq
        %v921 = vshrl.u32 %v920, 7
        %v922 = vsub.s32 0, %v921
        %v923 = vrot.slane %v919, %v922
        %v956 = vunpack.c.l.b16 %v271
        %v957 = vunpack.c.h.b16 %v271
        %v958 = vunpack.c.l.b16 %v272
        %v959 = vunpack.c.h.b16 %v272
        %v960 = vunpack.c.l.b16 %v273
        %v961 = vunpack.c.h.b16 %v273
        %v962 = vunpack.c.l.b16 %v274
        %v963 = vunpack.c.h.b16 %v274
        %v964 = vunpack.c.l.b16 %v275
        %v965 = vunpack.c.h.b16 %v275
        %v966 = vunpack.c.l.b16 %v276
        %v967 = vunpack.c.h.b16 %v276
        %v968 = vunpack.c.l.b16 %v277
        %v969 = vunpack.c.h.b16 %v277
        %v970 = vunpack.c.l.b16 %v278
        %v971 = vunpack.c.h.b16 %v278
        %v972 = vunpack.c.l.b16 %v279
        %v973 = vunpack.c.h.b16 %v279
        %v974 = vunpack.c.l.b16 %v280
        %v975 = vunpack.c.h.b16 %v280
        %v976 = vunpack.c.l.b16 %v281
        %v977 = vunpack.c.h.b16 %v281
        %v978 = vunpack.c.l.b16 %v282
        %v979 = vunpack.c.h.b16 %v282
        %v980 = vunpack.c.l.b16 %v283
        %v981 = vunpack.c.h.b16 %v283
        %v982 = vunpack.c.l.b16 %v284
        %v983 = vunpack.c.h.b16 %v284
        %v984 = vunpack.c.l.b16 %v285
        %v985 = vunpack.c.h.b16 %v285
        %v986 = vunpack.c.l.b16 %v286
        %v987 = vunpack.c.h.b16 %v286
        %v988 = vunpack.c.l.b16 %v287
        %v989 = vunpack.c.h.b16 %v287
        %v990 = vunpack.c.l.b16 %v288
        %v991 = vunpack.c.h.b16 %v288
        %v992 = vunpack.c.l.b16 %v289
        %v993 = vunpack.c.h.b16 %v289
        %v994 = vunpack.c.l.b16 %v290
        %v995 = vunpack.c.h.b16 %v290
        %v996 = vunpack.c.l.b16 %v291
        %v997 = vunpack.c.h.b16 %v291
        %v998 = vunpack.c.l.b16 %v292
        %v999 = vunpack.c.h.b16 %v292
        %v1000 = vunpack.c.l.b16 %v293
        %v1001 = vunpack.c.h.b16 %v293
        %v1002 = vunpack.c.l.b16 %v294
        %v1003 = vunpack.c.h.b16 %v294
        %v1004 = vunpack.c.l.b16 %v295
        %v1005 = vunpack.c.h.b16 %v295
        %v1006 = vunpack.c.l.b16 %v296
        %v1007 = vunpack.c.h.b16 %v296
        %v1008 = vunpack.c.l.b16 %v297
        %v1009 = vunpack.c.h.b16 %v297
        %v1010 = vunpack.c.l.b16 %v298
        %v1011 = vunpack.c.h.b16 %v298
        %v1012 = vunpack.c.l.b16 %v299
        %v1013 = vunpack.c.h.b16 %v299
        %v1014 = vunpack.c.l.b16 %v300
        %v1015 = vunpack.c.h.b16 %v300
        %v1016 = vunpack.c.l.b16 %v301
        %v1017 = vunpack.c.h.b16 %v301
        %v1018 = vunpack.c.l.b16 %v302
        %v1019 = vunpack.c.h.b16 %v302
        %v1020 = vpack.c.b16 %v958, %v956
        %v1021 = vpack.c.b16 %v959, %v957
        %v1022 = vpack.c.b16 %v962, %v960
        %v1023 = vpack.c.b16 %v963, %v961
        %v1024 = vpack.c.b16 %v966, %v964
        %v1025 = vpack.c.b16 %v967, %v965
        %v1026 = vpack.c.b16 %v970, %v968
        %v1027 = vpack.c.b16 %v971, %v969
        %v1028 = vpack.c.b16 %v974, %v972
        %v1029 = vpack.c.b16 %v975, %v973
        %v1030 = vpack.c.b16 %v978, %v976
        %v1031 = vpack.c.b16 %v979, %v977
        %v1032 = vpack.c.b16 %v982, %v980
        %v1033 = vpack.c.b16 %v983, %v981
        %v1034 = vpack.c.b16 %v986, %v984
        %v1035 = vpack.c.b16 %v987, %v985
        %v1036 = vpack.c.b16 %v990, %v988
        %v1037 = vpack.c.b16 %v991, %v989
        %v1038 = vpack.c.b16 %v994, %v992
        %v1039 = vpack.c.b16 %v995, %v993
        %v1040 = vpack.c.b16 %v998, %v996
        %v1041 = vpack.c.b16 %v999, %v997
        %v1042 = vpack.c.b16 %v1002, %v1000
        %v1043 = vpack.c.b16 %v1003, %v1001
        %v1044 = vpack.c.b16 %v1006, %v1004
        %v1045 = vpack.c.b16 %v1007, %v1005
        %v1046 = vpack.c.b16 %v1010, %v1008
        %v1047 = vpack.c.b16 %v1011, %v1009
        %v1048 = vpack.c.b16 %v1014, %v1012
        %v1049 = vpack.c.b16 %v1015, %v1013
        %v1050 = vpack.c.b16 %v1018, %v1016
        %v1051 = vpack.c.b16 %v1019, %v1017
        %1084 = vmatprep.subr.bf16.mxu0 0
        %1085 = vmatpush1.bf16.msra.mxu0 %v903
        %1086 = vmatprep.subr.bf16.mxu0 0
        %1087 = vmatpush1.bf16.msra.mxu0 %v904
        %1088 = vmatprep.subr.bf16.mxu0 0
        %1089 = vmatpush1.bf16.msra.mxu0 %v905
        %1090 = vmatprep.subr.bf16.mxu0 0
        %1091 = vmatpush1.bf16.msra.mxu0 %v906
        %1092 = vmatprep.subr.bf16.mxu0 0
        %1093 = vmatpush1.bf16.msra.mxu0 %v907
        %1094 = vmatprep.subr.bf16.mxu0 0
        %1095 = vmatpush1.bf16.msra.mxu0 %v908
        %1096 = vmatprep.subr.bf16.mxu0 0
        %1097 = vmatpush1.bf16.msra.mxu0 %v909
        %1098 = vmatprep.subr.bf16.mxu0 0
        %1099 = vmatpush1.bf16.msra.mxu0 %v910
        %1100 = vmatprep.subr.bf16.mxu0 0
        %1101 = vmatpush1.bf16.msra.mxu0 %v911
        %1102 = vmatprep.subr.bf16.mxu0 0
        %1103 = vmatpush1.bf16.msra.mxu0 %v912
        %1104 = vmatprep.subr.bf16.mxu0 0
        %1105 = vmatpush1.bf16.msra.mxu0 %v913
        %1106 = vmatprep.subr.bf16.mxu0 0
        %1107 = vmatpush1.bf16.msra.mxu0 %v914
        %1108 = vmatprep.subr.bf16.mxu0 0
        %1109 = vmatpush1.bf16.msra.mxu0 %v915
        %1110 = vmatprep.subr.bf16.mxu0 0
        %1111 = vmatpush1.bf16.msra.mxu0 %v916
        %1112 = vmatprep.subr.bf16.mxu0 0
        %1113 = vmatpush1.bf16.msra.mxu0 %v917
        %1114 = vmatprep.subr.bf16.mxu0 0
        %1115 = vmatpush1.bf16.msra.mxu0 %v918
        %1116 = vmatprep.mubr.bf16.mxu0 %v1021
        %1117 = vmatmul.mubr.bf16.gmra.mrb[0].mxu0 %v1020
        %v1118 = vpop.f32.mrb[0].mxu0
        %v1119 = vadd.f32 %v923, %v1118
        %v1120 = vpop.f32.mrb[0].mxu0
        %v1121 = vpop.f32.mrb[0].mxu0
        %v1122 = vadd.f32 %v923, %v1121
        %v1123 = vpop.f32.mrb[0].mxu0
        %1124 = vmatprep.mubr.bf16.mxu0 %v1023
        %1125 = vmatmul.mubr.bf16.gmra.mrb[0].mxu0 %v1022
        %v1126 = vpop.f32.mrb[0].mxu0
        %v1127 = vadd.f32 %v923, %v1126
        %v1128 = vpop.f32.mrb[0].mxu0
        %v1129 = vpop.f32.mrb[0].mxu0
        %v1130 = vadd.f32 %v923, %v1129
        %v1131 = vpop.f32.mrb[0].mxu0
        %1132 = vmatprep.mubr.bf16.mxu0 %v1025
        %1133 = vmatmul.mubr.bf16.gmra.mrb[0].mxu0 %v1024
        %v1134 = vpop.f32.mrb[0].mxu0
        %v1135 = vadd.f32 %v923, %v1134
        %v1136 = vpop.f32.mrb[0].mxu0
        %v1137 = vpop.f32.mrb[0].mxu0
        %v1138 = vadd.f32 %v923, %v1137
        %v1139 = vpop.f32.mrb[0].mxu0
        %1140 = vmatprep.mubr.bf16.mxu0 %v1027
        %1141 = vmatmul.mubr.bf16.gmra.mrb[0].mxu0 %v1026
        %v1142 = vpop.f32.mrb[0].mxu0
        %v1143 = vadd.f32 %v923, %v1142
        %v1144 = vpop.f32.mrb[0].mxu0
        %v1145 = vpop.f32.mrb[0].mxu0
        %v1146 = vadd.f32 %v923, %v1145
        %v1147 = vpop.f32.mrb[0].mxu0
        %1148 = vmatprep.mubr.bf16.mxu0 %v1029
        %1149 = vmatmul.mubr.bf16.gmra.mrb[0].mxu0 %v1028
        %v1150 = vpop.f32.mrb[0].mxu0
        %v1151 = vadd.f32 %v923, %v1150
        %v1152 = vpop.f32.mrb[0].mxu0
        %v1153 = vpop.f32.mrb[0].mxu0
        %v1154 = vadd.f32 %v923, %v1153
        %v1155 = vpop.f32.mrb[0].mxu0
        %1156 = vmatprep.mubr.bf16.mxu0 %v1031
        %1157 = vmatmul.mubr.bf16.gmra.mrb[0].mxu0 %v1030
        %v1158 = vpop.f32.mrb[0].mxu0
        %v1159 = vadd.f32 %v923, %v1158
        %v1160 = vpop.f32.mrb[0].mxu0
        %v1161 = vpop.f32.mrb[0].mxu0
        %v1162 = vadd.f32 %v923, %v1161
        %v1163 = vpop.f32.mrb[0].mxu0
        %1164 = vmatprep.mubr.bf16.mxu0 %v1033
        %1165 = vmatmul.mubr.bf16.gmra.mrb[0].mxu0 %v1032
        %v1166 = vpop.f32.mrb[0].mxu0
        %v1167 = vadd.f32 %v923, %v1166
        %v1168 = vpop.f32.mrb[0].mxu0
        %v1169 = vpop.f32.mrb[0].mxu0
        %v1170 = vadd.f32 %v923, %v1169
        %v1171 = vpop.f32.mrb[0].mxu0
        %1172 = vmatprep.mubr.bf16.mxu0 %v1035
        %1173 = vmatmul.mubr.bf16.gmra.mrb[0].mxu0 %v1034
        %v1174 = vpop.f32.mrb[0].mxu0
        %v1175 = vadd.f32 %v923, %v1174
        %v1176 = vpop.f32.mrb[0].mxu0
        %v1177 = vpop.f32.mrb[0].mxu0
        %v1178 = vadd.f32 %v923, %v1177
        %v1179 = vpop.f32.mrb[0].mxu0
        %1180 = vmatprep.mubr.bf16.mxu0 %v1037
        %1181 = vmatmul.mubr.bf16.gmra.mrb[0].mxu0 %v1036
        %v1182 = vpop.f32.mrb[0].mxu0
        %v1183 = vadd.f32 %v923, %v1182
        %v1184 = vpop.f32.mrb[0].mxu0
        %v1185 = vpop.f32.mrb[0].mxu0
        %v1186 = vadd.f32 %v923, %v1185
        %v1187 = vpop.f32.mrb[0].mxu0
        %1188 = vmatprep.mubr.bf16.mxu0 %v1039
        %1189 = vmatmul.mubr.bf16.gmra.mrb[0].mxu0 %v1038
        %v1190 = vpop.f32.mrb[0].mxu0
        %v1191 = vadd.f32 %v923, %v1190
        %v1192 = vpop.f32.mrb[0].mxu0
        %v1193 = vpop.f32.mrb[0].mxu0
        %v1194 = vadd.f32 %v923, %v1193
        %v1195 = vpop.f32.mrb[0].mxu0
        %1196 = vmatprep.mubr.bf16.mxu0 %v1041
        %1197 = vmatmul.mubr.bf16.gmra.mrb[0].mxu0 %v1040
        %v1198 = vpop.f32.mrb[0].mxu0
        %v1199 = vadd.f32 %v923, %v1198
        %v1200 = vpop.f32.mrb[0].mxu0
        %v1201 = vpop.f32.mrb[0].mxu0
        %v1202 = vadd.f32 %v923, %v1201
        %v1203 = vpop.f32.mrb[0].mxu0
        %1204 = vmatprep.mubr.bf16.mxu0 %v1043
        %1205 = vmatmul.mubr.bf16.gmra.mrb[0].mxu0 %v1042
        %v1206 = vpop.f32.mrb[0].mxu0
        %v1207 = vadd.f32 %v923, %v1206
        %v1208 = vpop.f32.mrb[0].mxu0
        %v1209 = vpop.f32.mrb[0].mxu0
        %v1210 = vadd.f32 %v923, %v1209
        %v1211 = vpop.f32.mrb[0].mxu0
        %1212 = vmatprep.mubr.bf16.mxu0 %v1045
        %1213 = vmatmul.mubr.bf16.gmra.mrb[0].mxu0 %v1044
        %v1214 = vpop.f32.mrb[0].mxu0
        %v1215 = vadd.f32 %v923, %v1214
        %v1216 = vpop.f32.mrb[0].mxu0
        %v1217 = vpop.f32.mrb[0].mxu0
        %v1218 = vadd.f32 %v923, %v1217
        %v1219 = vpop.f32.mrb[0].mxu0
        %1220 = vmatprep.mubr.bf16.mxu0 %v1047
        %1221 = vmatmul.mubr.bf16.gmra.mrb[0].mxu0 %v1046
        %v1222 = vpop.f32.mrb[0].mxu0
        %v1223 = vadd.f32 %v923, %v1222
        %v1224 = vpop.f32.mrb[0].mxu0
        %v1225 = vpop.f32.mrb[0].mxu0
        %v1226 = vadd.f32 %v923, %v1225
        %v1227 = vpop.f32.mrb[0].mxu0
        %1228 = vmatprep.mubr.bf16.mxu0 %v1049
        %1229 = vmatmul.mubr.bf16.gmra.mrb[0].mxu0 %v1048
        %v1230 = vpop.f32.mrb[0].mxu0
        %v1231 = vadd.f32 %v923, %v1230
        %v1232 = vpop.f32.mrb[0].mxu0
        %v1233 = vpop.f32.mrb[0].mxu0
        %v1234 = vadd.f32 %v923, %v1233
        %v1235 = vpop.f32.mrb[0].mxu0
        %1236 = vmatprep.mubr.bf16.mxu0 %v1051
        %1237 = vmatmul.mubr.bf16.gmra.mrb[0].mxu0 %v1050
        %v1238 = vpop.f32.mrb[0].mxu0
        %v1239 = vadd.f32 %v923, %v1238
        %v1240 = vpop.f32.mrb[0].mxu0
        %v1241 = vpop.f32.mrb[0].mxu0
        %v1242 = vadd.f32 %v923, %v1241
        %v1243 = vpop.f32.mrb[0].mxu0
        %1244 = vdwg.mxu0
        %v1245 = vmax.f32 %v1119, 0.0
        %v1246 = vmax.f32 %v1122, 0.0
        %v1247 = vmax.f32 %v1127, 0.0
        %v1248 = vmax.f32 %v1130, 0.0
        %v1249 = vmax.f32 %v1135, 0.0
        %v1250 = vmax.f32 %v1138, 0.0
        %v1251 = vmax.f32 %v1143, 0.0
        %v1252 = vmax.f32 %v1146, 0.0
        %v1253 = vmax.f32 %v1151, 0.0
        %v1254 = vmax.f32 %v1154, 0.0
        %v1255 = vmax.f32 %v1159, 0.0
        %v1256 = vmax.f32 %v1162, 0.0
        %v1257 = vmax.f32 %v1167, 0.0
        %v1258 = vmax.f32 %v1170, 0.0
        %v1259 = vmax.f32 %v1175, 0.0
        %v1260 = vmax.f32 %v1178, 0.0
        %v1261 = vmax.f32 %v1183, 0.0
        %v1262 = vmax.f32 %v1186, 0.0
        %v1263 = vmax.f32 %v1191, 0.0
        %v1264 = vmax.f32 %v1194, 0.0
        %v1265 = vmax.f32 %v1199, 0.0
        %v1266 = vmax.f32 %v1202, 0.0
        %v1267 = vmax.f32 %v1207, 0.0
        %v1268 = vmax.f32 %v1210, 0.0
        %v1269 = vmax.f32 %v1215, 0.0
        %v1270 = vmax.f32 %v1218, 0.0
        %v1271 = vmax.f32 %v1223, 0.0
        %v1272 = vmax.f32 %v1226, 0.0
        %v1273 = vmax.f32 %v1231, 0.0
        %v1274 = vmax.f32 %v1234, 0.0
        %v1275 = vmax.f32 %v1239, 0.0
        %v1276 = vmax.f32 %v1242, 0.0
        %v1277 = vadd.f32 %v535, %v1245
        %v1278 = vadd.f32 %v538, %v1246
        %v1279 = vadd.f32 %v543, %v1247
        %v1280 = vadd.f32 %v546, %v1248
        %v1281 = vadd.f32 %v551, %v1249
        %v1282 = vadd.f32 %v554, %v1250
        %v1283 = vadd.f32 %v559, %v1251
        %v1284 = vadd.f32 %v562, %v1252
        %v1285 = vadd.f32 %v567, %v1253
        %v1286 = vadd.f32 %v570, %v1254
        %v1287 = vadd.f32 %v575, %v1255
        %v1288 = vadd.f32 %v578, %v1256
        %v1289 = vadd.f32 %v583, %v1257
        %v1290 = vadd.f32 %v586, %v1258
        %v1291 = vadd.f32 %v591, %v1259
        %v1292 = vadd.f32 %v594, %v1260
        %v1293 = vadd.f32 %v599, %v1261
        %v1294 = vadd.f32 %v602, %v1262
        %v1295 = vadd.f32 %v607, %v1263
        %v1296 = vadd.f32 %v610, %v1264
        %v1297 = vadd.f32 %v615, %v1265
        %v1298 = vadd.f32 %v618, %v1266
        %v1299 = vadd.f32 %v623, %v1267
        %v1300 = vadd.f32 %v626, %v1268
        %v1301 = vadd.f32 %v631, %v1269
        %v1302 = vadd.f32 %v634, %v1270
        %v1303 = vadd.f32 %v639, %v1271
        %v1304 = vadd.f32 %v642, %v1272
        %v1305 = vadd.f32 %v647, %v1273
        %v1306 = vadd.f32 %v650, %v1274
        %v1307 = vadd.f32 %v655, %v1275
        %v1308 = vadd.f32 %v658, %v1276
        %v1309 = vpack.c.bf16 %v1278, %v1277
        %v1310 = vpack.c.bf16 %v1280, %v1279
        %v1311 = vpack.c.bf16 %v1282, %v1281
        %v1312 = vpack.c.bf16 %v1284, %v1283
        %v1313 = vpack.c.bf16 %v1286, %v1285
        %v1314 = vpack.c.bf16 %v1288, %v1287
        %v1315 = vpack.c.bf16 %v1290, %v1289
        %v1316 = vpack.c.bf16 %v1292, %v1291
        %v1317 = vpack.c.bf16 %v1294, %v1293
        %v1318 = vpack.c.bf16 %v1296, %v1295
        %v1319 = vpack.c.bf16 %v1298, %v1297
        %v1320 = vpack.c.bf16 %v1300, %v1299
        %v1321 = vpack.c.bf16 %v1302, %v1301
        %v1322 = vpack.c.bf16 %v1304, %v1303
        %v1323 = vpack.c.bf16 %v1306, %v1305
        %v1324 = vpack.c.bf16 %v1308, %v1307
        %s1325 = scalar_lea.vmem [#allocation7], 128
        %v1326 = vld [vmem:[%s1325] sm:$0xf]
        %v1327 = vld [vmem:[%s1325 + $0x4] sm:$0xf]
        %v1328 = vld [vmem:[%s1325 + $0x8] sm:$0xf]
        %v1329 = vld [vmem:[%s1325 + $0xc] sm:$0xf]
        %v1330 = vld [vmem:[%s1325 + $0x10] sm:$0xf]
        %v1331 = vld [vmem:[%s1325 + $0x14] sm:$0xf]
        %v1332 = vld [vmem:[%s1325 + $0x18] sm:$0xf]
        %v1333 = vld [vmem:[%s1325 + $0x1c] sm:$0xf]
        %v1334 = vld [vmem:[%s1325 + $0x20] sm:$0xf]
        %v1335 = vld [vmem:[%s1325 + $0x24] sm:$0xf]
        %v1336 = vld [vmem:[%s1325 + $0x28] sm:$0xf]
        %v1337 = vld [vmem:[%s1325 + $0x2c] sm:$0xf]
        %v1338 = vld [vmem:[%s1325 + $0x30] sm:$0xf]
        %v1339 = vld [vmem:[%s1325 + $0x34] sm:$0xf]
        %v1340 = vld [vmem:[%s1325 + $0x38] sm:$0xf]
        %v1341 = vld [vmem:[%s1325 + $0x3c] sm:$0xf]
        %v1358 = vunpack.c.l.b16 %v1326
        %v1359 = vunpack.c.l.b16 %v1327
        %v1360 = vunpack.c.l.b16 %v1328
        %v1361 = vunpack.c.l.b16 %v1329
        %v1362 = vunpack.c.l.b16 %v1330
        %v1363 = vunpack.c.l.b16 %v1331
        %v1364 = vunpack.c.l.b16 %v1332
        %v1365 = vunpack.c.l.b16 %v1333
        %v1366 = vunpack.c.l.b16 %v1334
        %v1367 = vunpack.c.l.b16 %v1335
        %v1368 = vunpack.c.l.b16 %v1336
        %v1369 = vunpack.c.l.b16 %v1337
        %v1370 = vunpack.c.l.b16 %v1338
        %v1371 = vunpack.c.l.b16 %v1339
        %v1372 = vunpack.c.l.b16 %v1340
        %v1373 = vunpack.c.l.b16 %v1341
        %v1374 = vpack.c.b16 %v1359, %v1358
        %v1375 = vpack.c.b16 %v1361, %v1360
        %v1376 = vpack.c.b16 %v1363, %v1362
        %v1377 = vpack.c.b16 %v1365, %v1364
        %v1378 = vpack.c.b16 %v1367, %v1366
        %v1379 = vpack.c.b16 %v1369, %v1368
        %v1380 = vpack.c.b16 %v1371, %v1370
        %v1381 = vpack.c.b16 %v1373, %v1372
        %1390 = vmatprep.subr.bf16.mxu0 0
        %1391 = vmatpush1.bf16.msra.mxu0 %v1374
        %1392 = vmatprep.subr.bf16.mxu0 0
        %1393 = vmatpush1.bf16.msra.mxu0 %v1375
        %1394 = vmatprep.subr.bf16.mxu0 0
        %1395 = vmatpush1.bf16.msra.mxu0 %v1376
        %1396 = vmatprep.subr.bf16.mxu0 0
        %1397 = vmatpush1.bf16.msra.mxu0 %v1377
        %1398 = vmatprep.subr.bf16.mxu0 0
        %1399 = vmatpush1.bf16.msra.mxu0 %v1378
        %1400 = vmatprep.subr.bf16.mxu0 0
        %1401 = vmatpush1.bf16.msra.mxu0 %v1379
        %1402 = vmatprep.subr.bf16.mxu0 0
        %1403 = vmatpush1.bf16.msra.mxu0 %v1380
        %1404 = vmatprep.subr.bf16.mxu0 0
        %1405 = vmatpush1.bf16.msra.mxu0 %v1381
        %1406 = vmatprep.subr.bf16.mxu0 0
        %1407 = vmatpush1.bf16.msra.mxu0 0
        %1408 = vmatprep.subr.bf16.mxu0 0
        %1409 = vmatpush1.bf16.msra.mxu0 0
        %1410 = vmatprep.subr.bf16.mxu0 0
        %1411 = vmatpush1.bf16.msra.mxu0 0
        %1412 = vmatprep.subr.bf16.mxu0 0
        %1413 = vmatpush1.bf16.msra.mxu0 0
        %1414 = vmatprep.subr.bf16.mxu0 0
        %1415 = vmatpush1.bf16.msra.mxu0 0
        %1416 = vmatprep.subr.bf16.mxu0 0
        %1417 = vmatpush1.bf16.msra.mxu0 0
        %1418 = vmatprep.subr.bf16.mxu0 0
        %1419 = vmatpush1.bf16.msra.mxu0 0
        %1420 = vmatprep.subr.bf16.mxu0 0
        %1421 = vmatpush1.bf16.msra.mxu0 0
        %1422 = vmatprep.mubr.bf16.mxu0 0
        %1423 = vmatmul.mubr.bf16.gmra.mrb[0].mxu0 %v1309
        %v1424 = vpop.f32.mrb[0].mxu0
        %v1425 = vadd.f32 0.0, %v1424
        %v1426 = vpop.f32.mrb[0].mxu0
        %v1427 = vpop.f32.mrb[0].mxu0
        %v1428 = vadd.f32 0.0, %v1427
        %v1429 = vpop.f32.mrb[0].mxu0
        %1430 = vmatprep.mubr.bf16.mxu0 0
        %1431 = vmatmul.mubr.bf16.gmra.mrb[0].mxu0 %v1310
        %v1432 = vpop.f32.mrb[0].mxu0
        %v1433 = vadd.f32 0.0, %v1432
        %v1434 = vpop.f32.mrb[0].mxu0
        %v1435 = vpop.f32.mrb[0].mxu0
        %v1436 = vadd.f32 0.0, %v1435
        %v1437 = vpop.f32.mrb[0].mxu0
        %1438 = vmatprep.mubr.bf16.mxu0 0
        %1439 = vmatmul.mubr.bf16.gmra.mrb[0].mxu0 %v1311
        %v1440 = vpop.f32.mrb[0].mxu0
        %v1441 = vadd.f32 0.0, %v1440
        %v1442 = vpop.f32.mrb[0].mxu0
        %v1443 = vpop.f32.mrb[0].mxu0
        %v1444 = vadd.f32 0.0, %v1443
        %v1445 = vpop.f32.mrb[0].mxu0
        %1446 = vmatprep.mubr.bf16.mxu0 0
        %1447 = vmatmul.mubr.bf16.gmra.mrb[0].mxu0 %v1312
        %v1448 = vpop.f32.mrb[0].mxu0
        %v1449 = vadd.f32 0.0, %v1448
        %v1450 = vpop.f32.mrb[0].mxu0
        %v1451 = vpop.f32.mrb[0].mxu0
        %v1452 = vadd.f32 0.0, %v1451
        %v1453 = vpop.f32.mrb[0].mxu0
        %1454 = vmatprep.mubr.bf16.mxu0 0
        %1455 = vmatmul.mubr.bf16.gmra.mrb[0].mxu0 %v1313
        %v1456 = vpop.f32.mrb[0].mxu0
        %v1457 = vadd.f32 0.0, %v1456
        %v1458 = vpop.f32.mrb[0].mxu0
        %v1459 = vpop.f32.mrb[0].mxu0
        %v1460 = vadd.f32 0.0, %v1459
        %v1461 = vpop.f32.mrb[0].mxu0
        %1462 = vmatprep.mubr.bf16.mxu0 0
        %1463 = vmatmul.mubr.bf16.gmra.mrb[0].mxu0 %v1314
        %v1464 = vpop.f32.mrb[0].mxu0
        %v1465 = vadd.f32 0.0, %v1464
        %v1466 = vpop.f32.mrb[0].mxu0
        %v1467 = vpop.f32.mrb[0].mxu0
        %v1468 = vadd.f32 0.0, %v1467
        %v1469 = vpop.f32.mrb[0].mxu0
        %1470 = vmatprep.mubr.bf16.mxu0 0
        %1471 = vmatmul.mubr.bf16.gmra.mrb[0].mxu0 %v1315
        %v1472 = vpop.f32.mrb[0].mxu0
        %v1473 = vadd.f32 0.0, %v1472
        %v1474 = vpop.f32.mrb[0].mxu0
        %v1475 = vpop.f32.mrb[0].mxu0
        %v1476 = vadd.f32 0.0, %v1475
        %v1477 = vpop.f32.mrb[0].mxu0
        %1478 = vmatprep.mubr.bf16.mxu0 0
        %1479 = vmatmul.mubr.bf16.gmra.mrb[0].mxu0 %v1316
        %v1480 = vpop.f32.mrb[0].mxu0
        %v1481 = vadd.f32 0.0, %v1480
        %v1482 = vpop.f32.mrb[0].mxu0
        %v1483 = vpop.f32.mrb[0].mxu0
        %v1484 = vadd.f32 0.0, %v1483
        %v1485 = vpop.f32.mrb[0].mxu0
        %1486 = vmatprep.mubr.bf16.mxu0 0
        %1487 = vmatmul.mubr.bf16.gmra.mrb[0].mxu0 %v1317
        %v1488 = vpop.f32.mrb[0].mxu0
        %v1489 = vadd.f32 0.0, %v1488
        %v1490 = vpop.f32.mrb[0].mxu0
        %v1491 = vpop.f32.mrb[0].mxu0
        %v1492 = vadd.f32 0.0, %v1491
        %v1493 = vpop.f32.mrb[0].mxu0
        %1494 = vmatprep.mubr.bf16.mxu0 0
        %1495 = vmatmul.mubr.bf16.gmra.mrb[0].mxu0 %v1318
        %v1496 = vpop.f32.mrb[0].mxu0
        %v1497 = vadd.f32 0.0, %v1496
        %v1498 = vpop.f32.mrb[0].mxu0
        %v1499 = vpop.f32.mrb[0].mxu0
        %v1500 = vadd.f32 0.0, %v1499
        %v1501 = vpop.f32.mrb[0].mxu0
        %1502 = vmatprep.mubr.bf16.mxu0 0
        %1503 = vmatmul.mubr.bf16.gmra.mrb[0].mxu0 %v1319
        %v1504 = vpop.f32.mrb[0].mxu0
        %v1505 = vadd.f32 0.0, %v1504
        %v1506 = vpop.f32.mrb[0].mxu0
        %v1507 = vpop.f32.mrb[0].mxu0
        %v1508 = vadd.f32 0.0, %v1507
        %v1509 = vpop.f32.mrb[0].mxu0
        %1510 = vmatprep.mubr.bf16.mxu0 0
        %1511 = vmatmul.mubr.bf16.gmra.mrb[0].mxu0 %v1320
        %v1512 = vpop.f32.mrb[0].mxu0
        %v1513 = vadd.f32 0.0, %v1512
        %v1514 = vpop.f32.mrb[0].mxu0
        %v1515 = vpop.f32.mrb[0].mxu0
        %v1516 = vadd.f32 0.0, %v1515
        %v1517 = vpop.f32.mrb[0].mxu0
        %1518 = vmatprep.mubr.bf16.mxu0 0
        %1519 = vmatmul.mubr.bf16.gmra.mrb[0].mxu0 %v1321
        %v1520 = vpop.f32.mrb[0].mxu0
        %v1521 = vadd.f32 0.0, %v1520
        %v1522 = vpop.f32.mrb[0].mxu0
        %v1523 = vpop.f32.mrb[0].mxu0
        %v1524 = vadd.f32 0.0, %v1523
        %v1525 = vpop.f32.mrb[0].mxu0
        %1526 = vmatprep.mubr.bf16.mxu0 0
        %1527 = vmatmul.mubr.bf16.gmra.mrb[0].mxu0 %v1322
        %v1528 = vpop.f32.mrb[0].mxu0
        %v1529 = vadd.f32 0.0, %v1528
        %v1530 = vpop.f32.mrb[0].mxu0
        %v1531 = vpop.f32.mrb[0].mxu0
        %v1532 = vadd.f32 0.0, %v1531
        %v1533 = vpop.f32.mrb[0].mxu0
        %1534 = vmatprep.mubr.bf16.mxu0 0
        %1535 = vmatmul.mubr.bf16.gmra.mrb[0].mxu0 %v1323
        %v1536 = vpop.f32.mrb[0].mxu0
        %v1537 = vadd.f32 0.0, %v1536
        %v1538 = vpop.f32.mrb[0].mxu0
        %v1539 = vpop.f32.mrb[0].mxu0
        %v1540 = vadd.f32 0.0, %v1539
        %v1541 = vpop.f32.mrb[0].mxu0
        %1542 = vmatprep.mubr.bf16.mxu0 0
        %1543 = vmatmul.mubr.bf16.gmra.mrb[0].mxu0 %v1324
        %v1544 = vpop.f32.mrb[0].mxu0
        %v1545 = vadd.f32 0.0, %v1544
        %v1546 = vpop.f32.mrb[0].mxu0
        %v1547 = vpop.f32.mrb[0].mxu0
        %v1548 = vadd.f32 0.0, %v1547
        %v1549 = vpop.f32.mrb[0].mxu0
        %1550 = vdwg.mxu0
        %v1551 = vpack.c.bf16 %v1428, %v1425
        %v1552 = vpack.c.bf16 %v1436, %v1433
        %v1553 = vpack.c.bf16 %v1444, %v1441
        %v1554 = vpack.c.bf16 %v1452, %v1449
        %v1555 = vpack.c.bf16 %v1460, %v1457
        %v1556 = vpack.c.bf16 %v1468, %v1465
        %v1557 = vpack.c.bf16 %v1476, %v1473
        %v1558 = vpack.c.bf16 %v1484, %v1481
        %v1559 = vpack.c.bf16 %v1492, %v1489
        %v1560 = vpack.c.bf16 %v1500, %v1497
        %v1561 = vpack.c.bf16 %v1508, %v1505
        %v1562 = vpack.c.bf16 %v1516, %v1513
        %v1563 = vpack.c.bf16 %v1524, %v1521
        %v1564 = vpack.c.bf16 %v1532, %v1529
        %v1565 = vpack.c.bf16 %v1540, %v1537
        %v1566 = vpack.c.bf16 %v1548, %v1545
        %v1567 = vld [vmem:[%s3 + $0x2] sm:$0x1]
        %v1568 = vlaneseq
        %v1569 = vshrl.u32 %v1568, 7
        %v1570 = vsub.s32 0, %v1569
        %v1571 = vrot.slane %v1567, %v1570
        %1572 = vmatprep.subr.bf16.mxu0 0
        %1573 = vmatpush1.bf16.msra.mxu0 %v1551
        %1574 = vmatprep.subr.bf16.mxu0 0
        %1575 = vmatpush1.bf16.msra.mxu0 %v1552
        %1576 = vmatprep.subr.bf16.mxu0 0
        %1577 = vmatpush1.bf16.msra.mxu0 %v1553
        %1578 = vmatprep.subr.bf16.mxu0 0
        %1579 = vmatpush1.bf16.msra.mxu0 %v1554
        %1580 = vmatprep.subr.bf16.mxu0 0
        %1581 = vmatpush1.bf16.msra.mxu0 %v1555
        %1582 = vmatprep.subr.bf16.mxu0 0
        %1583 = vmatpush1.bf16.msra.mxu0 %v1556
        %1584 = vmatprep.subr.bf16.mxu0 0
        %1585 = vmatpush1.bf16.msra.mxu0 %v1557
        %1586 = vmatprep.subr.bf16.mxu0 0
        %1587 = vmatpush1.bf16.msra.mxu0 %v1558
        %1588 = vmatprep.subr.bf16.mxu0 0
        %1589 = vmatpush1.bf16.msra.mxu0 %v1559
        %1590 = vmatprep.subr.bf16.mxu0 0
        %1591 = vmatpush1.bf16.msra.mxu0 %v1560
        %1592 = vmatprep.subr.bf16.mxu0 0
        %1593 = vmatpush1.bf16.msra.mxu0 %v1561
        %1594 = vmatprep.subr.bf16.mxu0 0
        %1595 = vmatpush1.bf16.msra.mxu0 %v1562
        %1596 = vmatprep.subr.bf16.mxu0 0
        %1597 = vmatpush1.bf16.msra.mxu0 %v1563
        %1598 = vmatprep.subr.bf16.mxu0 0
        %1599 = vmatpush1.bf16.msra.mxu0 %v1564
        %1600 = vmatprep.subr.bf16.mxu0 0
        %1601 = vmatpush1.bf16.msra.mxu0 %v1565
        %1602 = vmatprep.subr.bf16.mxu0 0
        %1603 = vmatpush1.bf16.msra.mxu0 %v1566
        %1604 = vmatprep.mubr.bf16.mxu0 %v1021
        %1605 = vmatmul.mubr.bf16.gmra.mrb[0].mxu0 %v1020
        %v1606 = vpop.f32.mrb[0].mxu0
        %v1607 = vadd.f32 %v1571, %v1606
        %v1608 = vpop.f32.mrb[0].mxu0
        %v1609 = vpop.f32.mrb[0].mxu0
        %v1610 = vadd.f32 %v1571, %v1609
        %v1611 = vpop.f32.mrb[0].mxu0
        %1612 = vmatprep.mubr.bf16.mxu0 %v1023
        %1613 = vmatmul.mubr.bf16.gmra.mrb[0].mxu0 %v1022
        %v1614 = vpop.f32.mrb[0].mxu0
        %v1615 = vadd.f32 %v1571, %v1614
        %v1616 = vpop.f32.mrb[0].mxu0
        %v1617 = vpop.f32.mrb[0].mxu0
        %v1618 = vadd.f32 %v1571, %v1617
        %v1619 = vpop.f32.mrb[0].mxu0
        %1620 = vmatprep.mubr.bf16.mxu0 %v1025
        %1621 = vmatmul.mubr.bf16.gmra.mrb[0].mxu0 %v1024
        %v1622 = vpop.f32.mrb[0].mxu0
        %v1623 = vadd.f32 %v1571, %v1622
        %v1624 = vpop.f32.mrb[0].mxu0
        %v1625 = vpop.f32.mrb[0].mxu0
        %v1626 = vadd.f32 %v1571, %v1625
        %v1627 = vpop.f32.mrb[0].mxu0
        %1628 = vmatprep.mubr.bf16.mxu0 %v1027
        %1629 = vmatmul.mubr.bf16.gmra.mrb[0].mxu0 %v1026
        %v1630 = vpop.f32.mrb[0].mxu0
        %v1631 = vadd.f32 %v1571, %v1630
        %v1632 = vpop.f32.mrb[0].mxu0
        %v1633 = vpop.f32.mrb[0].mxu0
        %v1634 = vadd.f32 %v1571, %v1633
        %v1635 = vpop.f32.mrb[0].mxu0
        %1636 = vmatprep.mubr.bf16.mxu0 %v1029
        %1637 = vmatmul.mubr.bf16.gmra.mrb[0].mxu0 %v1028
        %v1638 = vpop.f32.mrb[0].mxu0
        %v1639 = vadd.f32 %v1571, %v1638
        %v1640 = vpop.f32.mrb[0].mxu0
        %v1641 = vpop.f32.mrb[0].mxu0
        %v1642 = vadd.f32 %v1571, %v1641
        %v1643 = vpop.f32.mrb[0].mxu0
        %1644 = vmatprep.mubr.bf16.mxu0 %v1031
        %1645 = vmatmul.mubr.bf16.gmra.mrb[0].mxu0 %v1030
        %v1646 = vpop.f32.mrb[0].mxu0
        %v1647 = vadd.f32 %v1571, %v1646
        %v1648 = vpop.f32.mrb[0].mxu0
        %v1649 = vpop.f32.mrb[0].mxu0
        %v1650 = vadd.f32 %v1571, %v1649
        %v1651 = vpop.f32.mrb[0].mxu0
        %1652 = vmatprep.mubr.bf16.mxu0 %v1033
        %1653 = vmatmul.mubr.bf16.gmra.mrb[0].mxu0 %v1032
        %v1654 = vpop.f32.mrb[0].mxu0
        %v1655 = vadd.f32 %v1571, %v1654
        %v1656 = vpop.f32.mrb[0].mxu0
        %v1657 = vpop.f32.mrb[0].mxu0
        %v1658 = vadd.f32 %v1571, %v1657
        %v1659 = vpop.f32.mrb[0].mxu0
        %1660 = vmatprep.mubr.bf16.mxu0 %v1035
        %1661 = vmatmul.mubr.bf16.gmra.mrb[0].mxu0 %v1034
        %v1662 = vpop.f32.mrb[0].mxu0
        %v1663 = vadd.f32 %v1571, %v1662
        %v1664 = vpop.f32.mrb[0].mxu0
        %v1665 = vpop.f32.mrb[0].mxu0
        %v1666 = vadd.f32 %v1571, %v1665
        %v1667 = vpop.f32.mrb[0].mxu0
        %1668 = vmatprep.mubr.bf16.mxu0 %v1037
        %1669 = vmatmul.mubr.bf16.gmra.mrb[0].mxu0 %v1036
        %v1670 = vpop.f32.mrb[0].mxu0
        %v1671 = vadd.f32 %v1571, %v1670
        %v1672 = vpop.f32.mrb[0].mxu0
        %v1673 = vpop.f32.mrb[0].mxu0
        %v1674 = vadd.f32 %v1571, %v1673
        %v1675 = vpop.f32.mrb[0].mxu0
        %1676 = vmatprep.mubr.bf16.mxu0 %v1039
        %1677 = vmatmul.mubr.bf16.gmra.mrb[0].mxu0 %v1038
        %v1678 = vpop.f32.mrb[0].mxu0
        %v1679 = vadd.f32 %v1571, %v1678
        %v1680 = vpop.f32.mrb[0].mxu0
        %v1681 = vpop.f32.mrb[0].mxu0
        %v1682 = vadd.f32 %v1571, %v1681
        %v1683 = vpop.f32.mrb[0].mxu0
        %1684 = vmatprep.mubr.bf16.mxu0 %v1041
        %1685 = vmatmul.mubr.bf16.gmra.mrb[0].mxu0 %v1040
        %v1686 = vpop.f32.mrb[0].mxu0
        %v1687 = vadd.f32 %v1571, %v1686
        %v1688 = vpop.f32.mrb[0].mxu0
        %v1689 = vpop.f32.mrb[0].mxu0
        %v1690 = vadd.f32 %v1571, %v1689
        %v1691 = vpop.f32.mrb[0].mxu0
        %1692 = vmatprep.mubr.bf16.mxu0 %v1043
        %1693 = vmatmul.mubr.bf16.gmra.mrb[0].mxu0 %v1042
        %v1694 = vpop.f32.mrb[0].mxu0
        %v1695 = vadd.f32 %v1571, %v1694
        %v1696 = vpop.f32.mrb[0].mxu0
        %v1697 = vpop.f32.mrb[0].mxu0
        %v1698 = vadd.f32 %v1571, %v1697
        %v1699 = vpop.f32.mrb[0].mxu0
        %1700 = vmatprep.mubr.bf16.mxu0 %v1045
        %1701 = vmatmul.mubr.bf16.gmra.mrb[0].mxu0 %v1044
        %v1702 = vpop.f32.mrb[0].mxu0
        %v1703 = vadd.f32 %v1571, %v1702
        %v1704 = vpop.f32.mrb[0].mxu0
        %v1705 = vpop.f32.mrb[0].mxu0
        %v1706 = vadd.f32 %v1571, %v1705
        %v1707 = vpop.f32.mrb[0].mxu0
        %1708 = vmatprep.mubr.bf16.mxu0 %v1047
        %1709 = vmatmul.mubr.bf16.gmra.mrb[0].mxu0 %v1046
        %v1710 = vpop.f32.mrb[0].mxu0
        %v1711 = vadd.f32 %v1571, %v1710
        %v1712 = vpop.f32.mrb[0].mxu0
        %v1713 = vpop.f32.mrb[0].mxu0
        %v1714 = vadd.f32 %v1571, %v1713
        %v1715 = vpop.f32.mrb[0].mxu0
        %1716 = vmatprep.mubr.bf16.mxu0 %v1049
        %1717 = vmatmul.mubr.bf16.gmra.mrb[0].mxu0 %v1048
        %v1718 = vpop.f32.mrb[0].mxu0
        %v1719 = vadd.f32 %v1571, %v1718
        %v1720 = vpop.f32.mrb[0].mxu0
        %v1721 = vpop.f32.mrb[0].mxu0
        %v1722 = vadd.f32 %v1571, %v1721
        %v1723 = vpop.f32.mrb[0].mxu0
        %1724 = vmatprep.mubr.bf16.mxu0 %v1051
        %1725 = vmatmul.mubr.bf16.gmra.mrb[0].mxu0 %v1050
        %v1726 = vpop.f32.mrb[0].mxu0
        %v1727 = vadd.f32 %v1571, %v1726
        %v1728 = vpop.f32.mrb[0].mxu0
        %v1729 = vpop.f32.mrb[0].mxu0
        %v1730 = vadd.f32 %v1571, %v1729
        %v1731 = vpop.f32.mrb[0].mxu0
        %1732 = vdwg.mxu0
        %v1733 = vmax.f32 %v1607, 0.0
        %v1734 = vmax.f32 %v1610, 0.0
        %v1735 = vmax.f32 %v1615, 0.0
        %v1736 = vmax.f32 %v1618, 0.0
        %v1737 = vmax.f32 %v1623, 0.0
        %v1738 = vmax.f32 %v1626, 0.0
        %v1739 = vmax.f32 %v1631, 0.0
        %v1740 = vmax.f32 %v1634, 0.0
        %v1741 = vmax.f32 %v1639, 0.0
        %v1742 = vmax.f32 %v1642, 0.0
        %v1743 = vmax.f32 %v1647, 0.0
        %v1744 = vmax.f32 %v1650, 0.0
        %v1745 = vmax.f32 %v1655, 0.0
        %v1746 = vmax.f32 %v1658, 0.0
        %v1747 = vmax.f32 %v1663, 0.0
        %v1748 = vmax.f32 %v1666, 0.0
        %v1749 = vmax.f32 %v1671, 0.0
        %v1750 = vmax.f32 %v1674, 0.0
        %v1751 = vmax.f32 %v1679, 0.0
        %v1752 = vmax.f32 %v1682, 0.0
        %v1753 = vmax.f32 %v1687, 0.0
        %v1754 = vmax.f32 %v1690, 0.0
        %v1755 = vmax.f32 %v1695, 0.0
        %v1756 = vmax.f32 %v1698, 0.0
        %v1757 = vmax.f32 %v1703, 0.0
        %v1758 = vmax.f32 %v1706, 0.0
        %v1759 = vmax.f32 %v1711, 0.0
        %v1760 = vmax.f32 %v1714, 0.0
        %v1761 = vmax.f32 %v1719, 0.0
        %v1762 = vmax.f32 %v1722, 0.0
        %v1763 = vmax.f32 %v1727, 0.0
        %v1764 = vmax.f32 %v1730, 0.0
        %v1765 = vadd.f32 %v1277, %v1733
        %v1766 = vadd.f32 %v1278, %v1734
        %v1767 = vadd.f32 %v1279, %v1735
        %v1768 = vadd.f32 %v1280, %v1736
        %v1769 = vadd.f32 %v1281, %v1737
        %v1770 = vadd.f32 %v1282, %v1738
        %v1771 = vadd.f32 %v1283, %v1739
        %v1772 = vadd.f32 %v1284, %v1740
        %v1773 = vadd.f32 %v1285, %v1741
        %v1774 = vadd.f32 %v1286, %v1742
        %v1775 = vadd.f32 %v1287, %v1743
        %v1776 = vadd.f32 %v1288, %v1744
        %v1777 = vadd.f32 %v1289, %v1745
        %v1778 = vadd.f32 %v1290, %v1746
        %v1779 = vadd.f32 %v1291, %v1747
        %v1780 = vadd.f32 %v1292, %v1748
        %v1781 = vadd.f32 %v1293, %v1749
        %v1782 = vadd.f32 %v1294, %v1750
        %v1783 = vadd.f32 %v1295, %v1751
        %v1784 = vadd.f32 %v1296, %v1752
        %v1785 = vadd.f32 %v1297, %v1753
        %v1786 = vadd.f32 %v1298, %v1754
        %v1787 = vadd.f32 %v1299, %v1755
        %v1788 = vadd.f32 %v1300, %v1756
        %v1789 = vadd.f32 %v1301, %v1757
        %v1790 = vadd.f32 %v1302, %v1758
        %v1791 = vadd.f32 %v1303, %v1759
        %v1792 = vadd.f32 %v1304, %v1760
        %v1793 = vadd.f32 %v1305, %v1761
        %v1794 = vadd.f32 %v1306, %v1762
        %v1795 = vadd.f32 %v1307, %v1763
        %v1796 = vadd.f32 %v1308, %v1764
        %v1797 = vlaneseq
        %v1798 = vshrl.u32 %v1797, 7
        %v1799 = vadd.s32 %v1798, 8
        %v1800 = vlaneseq
        %v1801 = vand.u32 %v1800, 127
        %v1802 = vadd.s32 %v1801, 128
        %v1803 = vmul.u32 %v1798, 16
        %v1804 = vmul.u32 %v1799, 16
        %vm1805 = vcmp.ge.s32.totalorder %v1801, %v1803
        %vm1806 = vcmp.ge.s32.totalorder %v1802, %v1803
        %vm1807 = vcmp.ge.s32.totalorder %v1801, %v1804
        %vm1808 = vcmp.ge.s32.totalorder %v1802, %v1804
        %v1809 = vadd.s32 %v1798, 1
        %v1810 = vadd.s32 %v1799, 1
        %v1811 = vmul.u32 %v1809, 16
        %v1812 = vmul.u32 %v1810, 16
        %vm1813 = vcmp.lt.s32.totalorder %v1801, %v1811
        %vm1814 = vcmp.lt.s32.totalorder %v1802, %v1811
        %vm1815 = vcmp.lt.s32.totalorder %v1801, %v1812
        %vm1816 = vcmp.lt.s32.totalorder %v1802, %v1812
        %vm1817 = vmand %vm1805, %vm1813
        %vm1818 = vmand %vm1806, %vm1814
        %vm1819 = vmand %vm1807, %vm1815
        %vm1820 = vmand %vm1808, %vm1816
        %v1821 = vsel %vm1817, 0.0625, 0.0
        %v1822 = vsel %vm1818, 0.0625, 0.0
        %v1823 = vsel %vm1819, 0.0625, 0.0
        %v1824 = vsel %vm1820, 0.0625, 0.0
        %v1825 = vpack.c.bf16 %v1823, %v1821
        %v1826 = vpack.c.bf16 %v1824, %v1822
        %v1827 = vpack.c.bf16 %v1766, %v1765
        %v1828 = vpack.c.bf16 %v1768, %v1767
        %v1829 = vpack.c.bf16 %v1770, %v1769
        %v1830 = vpack.c.bf16 %v1772, %v1771
        %v1831 = vpack.c.bf16 %v1774, %v1773
        %v1832 = vpack.c.bf16 %v1776, %v1775
        %v1833 = vpack.c.bf16 %v1778, %v1777
        %v1834 = vpack.c.bf16 %v1780, %v1779
        %v1835 = vpack.c.bf16 %v1782, %v1781
        %v1836 = vpack.c.bf16 %v1784, %v1783
        %v1837 = vpack.c.bf16 %v1786, %v1785
        %v1838 = vpack.c.bf16 %v1788, %v1787
        %v1839 = vpack.c.bf16 %v1790, %v1789
        %v1840 = vpack.c.bf16 %v1792, %v1791
        %v1841 = vpack.c.bf16 %v1794, %v1793
        %v1842 = vpack.c.bf16 %v1796, %v1795
        %1843 = vmatprep.subr.bf16.mxu0 0
        %1844 = vmatpush1.bf16.msra.mxu0 %v1827
        %1845 = vmatprep.subr.bf16.mxu0 0
        %1846 = vmatpush1.bf16.msra.mxu0 %v1828
        %1847 = vmatprep.subr.bf16.mxu0 0
        %1848 = vmatpush1.bf16.msra.mxu0 %v1829
        %1849 = vmatprep.subr.bf16.mxu0 0
        %1850 = vmatpush1.bf16.msra.mxu0 %v1830
        %1851 = vmatprep.subr.bf16.mxu0 0
        %1852 = vmatpush1.bf16.msra.mxu0 %v1831
        %1853 = vmatprep.subr.bf16.mxu0 0
        %1854 = vmatpush1.bf16.msra.mxu0 %v1832
        %1855 = vmatprep.subr.bf16.mxu0 0
        %1856 = vmatpush1.bf16.msra.mxu0 %v1833
        %1857 = vmatprep.subr.bf16.mxu0 0
        %1858 = vmatpush1.bf16.msra.mxu0 %v1834
        %1859 = vmatprep.subr.bf16.mxu0 0
        %1860 = vmatpush1.bf16.msra.mxu0 %v1835
        %1861 = vmatprep.subr.bf16.mxu0 0
        %1862 = vmatpush1.bf16.msra.mxu0 %v1836
        %1863 = vmatprep.subr.bf16.mxu0 0
        %1864 = vmatpush1.bf16.msra.mxu0 %v1837
        %1865 = vmatprep.subr.bf16.mxu0 0
        %1866 = vmatpush1.bf16.msra.mxu0 %v1838
        %1867 = vmatprep.subr.bf16.mxu0 0
        %1868 = vmatpush1.bf16.msra.mxu0 %v1839
        %1869 = vmatprep.subr.bf16.mxu0 0
        %1870 = vmatpush1.bf16.msra.mxu0 %v1840
        %1871 = vmatprep.subr.bf16.mxu0 0
        %1872 = vmatpush1.bf16.msra.mxu0 %v1841
        %1873 = vmatprep.subr.bf16.mxu0 0
        %1874 = vmatpush1.bf16.msra.mxu0 %v1842
        %1875 = vmatprep.mubr.bf16.mxu0 %v1826
        %1876 = vmatmul.mubr.bf16.gmra.mrb[0].mxu0 %v1825
        %v1877 = vpop.f32.mrb[0].mxu0
        %v1878 = vadd.f32 0.0, %v1877
        %v1879 = vpop.f32.mrb[0].mxu0
        %v1880 = vpop.f32.mrb[0].mxu0
        %v1881 = vadd.f32 0.0, %v1880
        %v1882 = vpop.f32.mrb[0].mxu0
        %1883 = vdwg.mxu0
        %v1884 = vpack.c.bf16 %v1881, %v1878
        %s1885 = scalar_lea.vmem [#allocation7], 192
        %v1886 = vld [vmem:[%s1885] sm:$0xf]
        %v1887 = vld [vmem:[%s1885 + $0x4] sm:$0xf]
        %v1888 = vld [vmem:[%s1885 + $0x8] sm:$0xf]
        %v1889 = vld [vmem:[%s1885 + $0xc] sm:$0xf]
        %v1890 = vld [vmem:[%s1885 + $0x10] sm:$0xf]
        %v1891 = vld [vmem:[%s1885 + $0x14] sm:$0xf]
        %v1892 = vld [vmem:[%s1885 + $0x18] sm:$0xf]
        %v1893 = vld [vmem:[%s1885 + $0x1c] sm:$0xf]
        %v1894 = vld [vmem:[%s1885 + $0x20] sm:$0xf]
        %v1895 = vld [vmem:[%s1885 + $0x24] sm:$0xf]
        %v1896 = vld [vmem:[%s1885 + $0x28] sm:$0xf]
        %v1897 = vld [vmem:[%s1885 + $0x2c] sm:$0xf]
        %v1898 = vld [vmem:[%s1885 + $0x30] sm:$0xf]
        %v1899 = vld [vmem:[%s1885 + $0x34] sm:$0xf]
        %v1900 = vld [vmem:[%s1885 + $0x38] sm:$0xf]
        %v1901 = vld [vmem:[%s1885 + $0x3c] sm:$0xf]
        %v1918 = vunpack.c.l.b16 %v1886
        %v1919 = vunpack.c.l.b16 %v1887
        %v1920 = vunpack.c.l.b16 %v1888
        %v1921 = vunpack.c.l.b16 %v1889
        %v1922 = vunpack.c.l.b16 %v1890
        %v1923 = vunpack.c.l.b16 %v1891
        %v1924 = vunpack.c.l.b16 %v1892
        %v1925 = vunpack.c.l.b16 %v1893
        %v1926 = vunpack.c.l.b16 %v1894
        %v1927 = vunpack.c.l.b16 %v1895
        %v1928 = vunpack.c.l.b16 %v1896
        %v1929 = vunpack.c.l.b16 %v1897
        %v1930 = vunpack.c.l.b16 %v1898
        %v1931 = vunpack.c.l.b16 %v1899
        %v1932 = vunpack.c.l.b16 %v1900
        %v1933 = vunpack.c.l.b16 %v1901
        %v1934 = vpack.c.b16 %v1919, %v1918
        %v1935 = vpack.c.b16 %v1921, %v1920
        %v1936 = vpack.c.b16 %v1923, %v1922
        %v1937 = vpack.c.b16 %v1925, %v1924
        %v1938 = vpack.c.b16 %v1927, %v1926
        %v1939 = vpack.c.b16 %v1929, %v1928
        %v1940 = vpack.c.b16 %v1931, %v1930
        %v1941 = vpack.c.b16 %v1933, %v1932
        %1950 = vmatprep.subr.bf16.mxu0 0
        %1951 = vmatpush1.bf16.msra.mxu0 %v1934
        %1952 = vmatprep.subr.bf16.mxu0 0
        %1953 = vmatpush1.bf16.msra.mxu0 %v1935
        %1954 = vmatprep.subr.bf16.mxu0 0
        %1955 = vmatpush1.bf16.msra.mxu0 %v1936
        %1956 = vmatprep.subr.bf16.mxu0 0
        %1957 = vmatpush1.bf16.msra.mxu0 %v1937
        %1958 = vmatprep.subr.bf16.mxu0 0
        %1959 = vmatpush1.bf16.msra.mxu0 %v1938
        %1960 = vmatprep.subr.bf16.mxu0 0
        %1961 = vmatpush1.bf16.msra.mxu0 %v1939
        %1962 = vmatprep.subr.bf16.mxu0 0
        %1963 = vmatpush1.bf16.msra.mxu0 %v1940
        %1964 = vmatprep.subr.bf16.mxu0 0
        %1965 = vmatpush1.bf16.msra.mxu0 %v1941
        %1966 = vmatprep.subr.bf16.mxu0 0
        %1967 = vmatpush1.bf16.msra.mxu0 0
        %1968 = vmatprep.subr.bf16.mxu0 0
        %1969 = vmatpush1.bf16.msra.mxu0 0
        %1970 = vmatprep.subr.bf16.mxu0 0
        %1971 = vmatpush1.bf16.msra.mxu0 0
        %1972 = vmatprep.subr.bf16.mxu0 0
        %1973 = vmatpush1.bf16.msra.mxu0 0
        %1974 = vmatprep.subr.bf16.mxu0 0
        %1975 = vmatpush1.bf16.msra.mxu0 0
        %1976 = vmatprep.subr.bf16.mxu0 0
        %1977 = vmatpush1.bf16.msra.mxu0 0
        %1978 = vmatprep.subr.bf16.mxu0 0
        %1979 = vmatpush1.bf16.msra.mxu0 0
        %1980 = vmatprep.subr.bf16.mxu0 0
        %1981 = vmatpush1.bf16.msra.mxu0 0
        %1982 = vmatprep.mubr.bf16.mxu0 0
        %1983 = vmatmul.mubr.bf16.gmra.mrb[0].mxu0 %v1884
        %v1984 = vpop.f32.mrb[0].mxu0
        %v1985 = vadd.f32 0.0, %v1984
        %v1986 = vpop.f32.mrb[0].mxu0
        %v1987 = vpop.f32.mrb[0].mxu0
        %v1988 = vadd.f32 0.0, %v1987
        %v1989 = vpop.f32.mrb[0].mxu0
        %1990 = vdwg.mxu0
        %1991 = vst [vmem:[%s269] sm:$0xff] %v1985
        %1992 = vst [vmem:[%s269 + $0x8] sm:$0xff] %v1988
        %s1993 = sand.u32 %s126, 1
        %s1994 = scalar_lea.sflag [#allocation4], %s1993
        %s1995 = sand.u32 %s126, 1
        %s1996 = smul.addr %s1995, 16
        %s1997 = scalar_lea.vmem [#allocation8], %s1996
        // Predicated region
        $region49: #{tpu_custom_call.1} parent=35 // pred_check
          %p1998 = pneg %p136
        $region50: #{tpu_custom_call.1} parent=35 // pred_check_branch
          %2000 = sbr.rel (%p1998) target = $region52
        $region51: #{tpu_custom_call.1} parent=35 // pred_region
          %s2002 = ssub.s32 256, 256
          %2003 = vsyncadd %s1994, %s2002
          %s2004 = smul.addr %s24, 2
          %s2005 = smul.addr %s2004, 128
          %s2006 = scalar_lea.hbm %s4, %s2005
          %s2007 = sshll.u32 %s1997, 4
          %s2008 = int_to_ptr.vmem [resolvable:$true] %s2007
          %2013 = dma.vmem_to_hbm [thread:$0]  %s2008, 256, %s2006, %s1994, 128, 128, 8
        $region52: #{tpu_custom_call.1} parent=35 // pred_fallthru
          _
      $region36: #{tpu_custom_call.1} parent=5 // pred_fallthru
        _
      %p2014 = scmp.le.s32.totalorder 2, %s19
      // Predicated region
      $region53: #{tpu_custom_call.1} parent=5 // pred_check
        %p2015 = pneg %p2014
      $region54: #{tpu_custom_call.1} parent=5 // pred_check_branch
        %2017 = sbr.rel (%p2015) target = $region56
      $region55: #{tpu_custom_call.1} parent=5 // pred_region
        %s2018 = ssub.s32 %s19, 2
        // Predicated region
        $region57: #{tpu_custom_call.1} parent=55 // pred_check
          %p2019 = pneg %p142
        $region58: #{tpu_custom_call.1} parent=55 // pred_check_branch
          %2021 = sbr.rel (%p2019) target = $region60
        $region59: #{tpu_custom_call.1} parent=55 // pred_region
          %s2022 = sand.u32 %s127, 1
          %s2023 = scalar_lea.sflag [#allocation4], %s2022
          %s2024 = sand.u32 %s127, 1
          %s2025 = smul.addr %s2024, 16
          %s2026 = scalar_lea.vmem [#allocation8], %s2025
          %2027 = dma.done %s2023, 256
        $region60: #{tpu_custom_call.1} parent=55 // pred_fallthru
          _
      $region56: #{tpu_custom_call.1} parent=5 // pred_fallthru
        _
    $region6: #{tpu_custom_call.1} parent=1 // loop_footer
      %s23 = sadd.s32 1, %s19
    $region7: #{tpu_custom_call.1} parent=1 // loop_footer_branch
      %18 = sbr.rel target = $region3
    $region8: #{tpu_custom_call.1} parent=1 // loop_exit
      _
    %2028 = vsyncpa [#allocation3], 1
    %s2029 = scalar_lea.sflag [#allocation3], 1
    %2030 = vsyncpa %s2029, 1
    %2031 = vsyncpa [#allocation6], 1
    %s2032 = scalar_lea.sflag [#allocation6], 1
    %2033 = vsyncpa %s2032, 1
    %2034 = vsyncpa [#allocation4], 1
    %s2035 = scalar_lea.sflag [#allocation4], 1
    %2036 = vsyncpa %s2035, 1

</llo_original>
